<compile_context>
chip_gen: v7x
topology: tpu7x:2x2x1
jax: 0.10.0
libtpu: 0.0.40
codegen_flags: <defaults>
</compile_context>

<pallas_src>
import jax
import jax.numpy as jnp
from jax.experimental import pallas as pl
from jax.experimental.pallas import tpu as pltpu


LOG_STD_MIN = -10.0
LOG_STD_MAX = 2.0
LANE = 128


def actor_kernel(obs_ref, wx_ref, w1h_ref, w2h_ref, b_ref, mu_ref):
    # Static shapes: obs [TB, D] bf16, wx [D, 2H+AP] bf16, w1h [H, H] bf16,
    #                w2h [H, AP] bf16, b [1, 2H+AP] f32, mu [TB, AP] bf16
    H = w1h_ref.shape[0]

    x = obs_ref[...]                                                   # [TB, D] bf16

    # One fused x-side projection: x @ [W0 | W1x | W2x_pad] -> [TB, 2H+AP] f32,
    # plus the fused bias slab [b0 | b1 | b2_pad] added once.
    xp = jnp.dot(x, wx_ref[...], preferred_element_type=jnp.float32)
    xp = xp + b_ref[...]

    # layer 0: relu(x @ W0 + b0)            (128-aligned lane slice)
    h0 = jnp.maximum(xp[:, :H], 0.0)                                   # [TB, H] f32

    # layer 1 (dense skip): relu(h0 @ W1h + x @ W1x + b1)
    h1 = jnp.maximum(
        jnp.dot(h0.astype(jnp.bfloat16), w1h_ref[...],
                preferred_element_type=jnp.float32)
        + xp[:, H:2 * H], 0.0)                                         # [TB, H] f32

    # output layer (dense skip, no activation), lane-padded to AP columns
    mu = (jnp.dot(h1.astype(jnp.bfloat16), w2h_ref[...],
                  preferred_element_type=jnp.float32)
          + xp[:, 2 * H:])                                             # [TB, AP] f32
    mu_ref[...] = mu.astype(mu_ref.dtype)


def prepare_params(p):
    """One-time preprocessing: pad the action dim to 128 lanes, fuse the x-side
    weights into one slab, fuse the biases, cast matmul weights to bf16, and
    precompute std (obs-independent)."""
    H = p["w0"].shape[1]
    A = p["w2h"].shape[1]
    AP = ((A + LANE - 1) // LANE) * LANE
    pad = AP - A

    w2h = jnp.pad(p["w2h"], ((0, 0), (0, pad)))
    w2x = jnp.pad(p["w2x"], ((0, 0), (0, pad)))
    b2 = jnp.pad(p["b2"], ((0, 0), (0, pad)))
    wx_all = jnp.concatenate([p["w0"], p["w1x"], w2x], axis=1)          # [D, 2H+AP]
    b_all = jnp.concatenate([p["b0"], p["b1"], b2], axis=1)             # [1, 2H+AP]

    std = jnp.exp(jnp.clip(p["var_param"], LOG_STD_MIN, LOG_STD_MAX))[0]  # [A]

    prepared = {
        "wx_all": wx_all.astype(jnp.bfloat16),
        "w1h": p["w1h"].astype(jnp.bfloat16),
        "w2h": w2h.astype(jnp.bfloat16),
        "b_all": b_all.astype(jnp.float32),
        "std": std,
    }
    return prepared, A


def _const_spec(shape, pipeline_mode):
    idx = lambda i, s=shape: (0,) * len(s)
    if pipeline_mode is None:
        return pl.BlockSpec(shape, idx)
    return pl.BlockSpec(shape, idx, pipeline_mode=pipeline_mode)


def _run_actor_call(obs_bf, prepared, TB, B_pad, resident_mode):
    D = obs_bf.shape[1]
    H = prepared["w1h"].shape[0]
    NX = prepared["b_all"].shape[1]
    AP = NX - 2 * H
    grid = (B_pad // TB,)

    flops = 2 * B_pad * (D * NX + H * H + H * AP)
    bytes_accessed = (2 * B_pad * D                     # obs (bf16) in
                      + 2 * (D * NX + H * H + H * AP)   # bf16 weights
                      + 4 * NX                          # f32 fused bias
                      + 2 * B_pad * AP)                 # bf16 mu out

    return pl.pallas_call(
        actor_kernel,
        grid=grid,
        in_specs=[
            pl.BlockSpec((TB, D), lambda i: (i, 0)),      # obs: streamed per tile
            _const_spec((D, NX), resident_mode),          # fused x-side weights
            _const_spec((H, H), resident_mode),           # W1h (resident)
            _const_spec((H, AP), resident_mode),          # W2h padded (resident)
            _const_spec((1, NX), resident_mode),          # fused bias slab
        ],
        out_specs=pl.BlockSpec((TB, AP), lambda i: (i, 0)),
        out_shape=jax.ShapeDtypeStruct((B_pad, AP), jnp.bfloat16),
        compiler_params=pltpu.CompilerParams(
            dimension_semantics=("parallel",)),            # v7x: split batch over 2 TCs
        cost_estimate=pl.CostEstimate(
            flops=flops, transcendentals=0, bytes_accessed=bytes_accessed),
    )(obs_bf, prepared["wx_all"], prepared["w1h"], prepared["w2h"],
      prepared["b_all"])


def diag_gaussian_actor_forward(obs, prepared, action_dim):
    """Returns (mu [B, A] f32, std [A] f32) — parameters of Independent(Normal)."""
    B, D = obs.shape

    # Batch tiling:
    #  - large B: 256-row tiles (fills the 256-wide MXU on v6e/v7x, amortizes
    #    per-grid-step overhead) and always yields grid >= 2.
    #  - mid-size B (128..511): split into two tiles so v7x's second TC works.
    #  - tiny B: one tile, padded to a multiple of 8 sublanes.
    if B >= 512:
        TB = 256
    elif B >= 128:
        TB = (((B + 1) // 2) + 7) // 8 * 8
    else:
        TB = max(8, ((B + 7) // 8) * 8)
    B_pad = ((B + TB - 1) // TB) * TB

    obs_bf = obs.astype(jnp.bfloat16)
    if B_pad != B:
        obs_bf = jnp.pad(obs_bf, ((0, B_pad - B), (0, 0)))

    try:
        # Single-buffer the resident (constant index_map) weight/bias operands.
        mu = jax.block_until_ready(
            _run_actor_call(obs_bf, prepared, TB, B_pad, pl.Buffered(1)))
    except Exception:
        # Fallback: default double-buffering if Buffered(1) is rejected.
        mu = _run_actor_call(obs_bf, prepared, TB, B_pad, None)

    mu = mu[:B, :action_dim].astype(jnp.float32)
    return mu, prepared["std"]


def init_params(key, obs_dim, action_dim, hidden=256):
    """Deterministic synthetic init. Weights stored as [in, out] (pre-transposed)."""
    ks = jax.random.split(key, 7)
    s = 0.05
    return {
        "w0":  s * jax.random.normal(ks[0], (obs_dim, hidden), jnp.float32),
        "b0":  s * jax.random.normal(ks[1], (1, hidden), jnp.float32),
        # Linear(hidden + obs_dim, hidden) split into h-part and x-part
        "w1h": s * jax.random.normal(ks[2], (hidden, hidden), jnp.float32),
        "w1x": s * jax.random.normal(ks[3], (obs_dim, hidden), jnp.float32),
        "b1":  s * jax.random.normal(ks[4], (1, hidden), jnp.float32),
        # Linear(hidden + obs_dim, action_dim) split into h-part and x-part
        "w2h": s * jax.random.normal(ks[5], (hidden, action_dim), jnp.float32),
        "w2x": s * jax.random.normal(ks[6], (obs_dim, action_dim), jnp.float32),
        "b2":  jnp.zeros((1, action_dim), jnp.float32),
        # nn.Parameter(broadcast_to(0, action_dim)) -> zeros
        "var_param": jnp.zeros((1, action_dim), jnp.float32),
    }


def reference_forward(obs, p):
    x = obs
    h0 = jax.nn.relu(x @ p["w0"] + p["b0"])
    h1 = jax.nn.relu(h0 @ p["w1h"] + x @ p["w1x"] + p["b1"])
    mu = h1 @ p["w2h"] + x @ p["w2x"] + p["b2"]
    std = jnp.exp(jnp.clip(p["var_param"], LOG_STD_MIN, LOG_STD_MAX))[0]
    return mu, std


if __name__ == "__main__":
    key = jax.random.PRNGKey(0)
    k_obs, k_params = jax.random.split(key)

    B, OBS_DIM, ACTION_DIM, HIDDEN = 8, 32, 8, 256
    obs = jax.random.normal(k_obs, (B, OBS_DIM), jnp.float32)
    params = init_params(k_params, OBS_DIM, ACTION_DIM, HIDDEN)

    prepared, A = prepare_params(params)
    mu, std = diag_gaussian_actor_forward(obs, prepared, A)
    mu, std = jax.block_until_ready(mu), jax.block_until_ready(std)

    mu_ref, std_ref = reference_forward(obs, params)
    assert mu.shape == (B, ACTION_DIM) and std.shape == (ACTION_DIM,)
    # bf16 matmul operands (f32 accumulation) -> relaxed tolerance vs f32 ref.
    assert jnp.allclose(mu, mu_ref, atol=2e-2, rtol=2e-2)
    assert jnp.allclose(std, std_ref, atol=1e-6, rtol=1e-6)

    print("KERNEL_OK")
</pallas_src>

<mosaic_0001>
module attributes {stable_mosaic.version = 11 : i64} {
  func.func @actor_kernel(%arg0: i32, %arg1: memref<8x32xbf16, #tpu.memory_space<vmem>>, %arg2: memref<32x640xbf16, #tpu.memory_space<vmem>>, %arg3: memref<256x256xbf16, #tpu.memory_space<vmem>>, %arg4: memref<256x128xbf16, #tpu.memory_space<vmem>>, %arg5: memref<1x640xf32, #tpu.memory_space<vmem>>, %arg6: memref<8x128xbf16, #tpu.memory_space<vmem>>) attributes {dimension_semantics = [#tpu.dimension_semantics<parallel>], iteration_bounds = array<i64: 1>, scalar_prefetch = 0 : i64, scratch_operands = 0 : i64, tpu.core_type = #tpu.core_type<tc>, window_params = [{transform_indices = @transform_0, window_bounds = array<i64: 8, 32>}, {pipeline_mode = #tpu.pipeline_mode<synchronous>, transform_indices = @transform_1, window_bounds = array<i64: 32, 640>}, {pipeline_mode = #tpu.pipeline_mode<synchronous>, transform_indices = @transform_2, window_bounds = array<i64: 256, 256>}, {pipeline_mode = #tpu.pipeline_mode<synchronous>, transform_indices = @transform_3, window_bounds = array<i64: 256, 128>}, {pipeline_mode = #tpu.pipeline_mode<synchronous>, transform_indices = @transform_4, window_bounds = array<i64: 1, 640>}, {transform_indices = @transform_5, window_bounds = array<i64: 8, 128>}]} {
    %c0 = arith.constant 0 : index
    %c0_0 = arith.constant 0 : index
    %0 = vector.load %arg1[%c0, %c0_0] : memref<8x32xbf16, #tpu.memory_space<vmem>>, vector<8x32xbf16>
    %c0_1 = arith.constant 0 : index
    %c0_2 = arith.constant 0 : index
    %1 = vector.load %arg2[%c0_1, %c0_2] : memref<32x640xbf16, #tpu.memory_space<vmem>>, vector<32x640xbf16>
    %cst = arith.constant dense<0.000000e+00> : vector<8x640xf32>
    %2 = tpu.matmul %0, %1, %cst {dimension_numbers = #tpu.dot_dimension_numbers<[1], [0], [0], [1], [0, 0, 1, 1], [], []>} : vector<8x32xbf16>, vector<32x640xbf16>, vector<8x640xf32> -> vector<8x640xf32>
    %c0_3 = arith.constant 0 : index
    %c0_4 = arith.constant 0 : index
    %3 = vector.load %arg5[%c0_3, %c0_4] : memref<1x640xf32, #tpu.memory_space<vmem>>, vector<1x640xf32>
    %4 = vector.broadcast %3 : vector<1x640xf32> to vector<8x640xf32>
    %5 = arith.addf %2, %4 : vector<8x640xf32>
    %6 = vector.extract_strided_slice %5 {offsets = [0, 0], sizes = [8, 256], strides = [1, 1]} : vector<8x640xf32> to vector<8x256xf32>
    %cst_5 = arith.constant 0.000000e+00 : f32
    %7 = vector.broadcast %cst_5 : f32 to vector<8x256xf32>
    %8 = arith.maximumf %6, %7 : vector<8x256xf32>
    %9 = arith.truncf %8 : vector<8x256xf32> to vector<8x256xbf16>
    %c0_6 = arith.constant 0 : index
    %c0_7 = arith.constant 0 : index
    %10 = vector.load %arg3[%c0_6, %c0_7] : memref<256x256xbf16, #tpu.memory_space<vmem>>, vector<256x256xbf16>
    %cst_8 = arith.constant dense<0.000000e+00> : vector<8x256xf32>
    %11 = tpu.matmul %9, %10, %cst_8 {dimension_numbers = #tpu.dot_dimension_numbers<[1], [0], [0], [1], [0, 0, 1, 1], [], []>} : vector<8x256xbf16>, vector<256x256xbf16>, vector<8x256xf32> -> vector<8x256xf32>
    %12 = vector.extract_strided_slice %5 {offsets = [0, 256], sizes = [8, 256], strides = [1, 1]} : vector<8x640xf32> to vector<8x256xf32>
    %13 = arith.addf %11, %12 : vector<8x256xf32>
    %cst_9 = arith.constant 0.000000e+00 : f32
    %14 = vector.broadcast %cst_9 : f32 to vector<8x256xf32>
    %15 = arith.maximumf %13, %14 : vector<8x256xf32>
    %16 = arith.truncf %15 : vector<8x256xf32> to vector<8x256xbf16>
    %c0_10 = arith.constant 0 : index
    %c0_11 = arith.constant 0 : index
    %17 = vector.load %arg4[%c0_10, %c0_11] : memref<256x128xbf16, #tpu.memory_space<vmem>>, vector<256x128xbf16>
    %cst_12 = arith.constant dense<0.000000e+00> : vector<8x128xf32>
    %18 = tpu.matmul %16, %17, %cst_12 {dimension_numbers = #tpu.dot_dimension_numbers<[1], [0], [0], [1], [0, 0, 1, 1], [], []>} : vector<8x256xbf16>, vector<256x128xbf16>, vector<8x128xf32> -> vector<8x128xf32>
    %19 = vector.extract_strided_slice %5 {offsets = [0, 512], sizes = [8, 128], strides = [1, 1]} : vector<8x640xf32> to vector<8x128xf32>
    %20 = arith.addf %18, %19 : vector<8x128xf32>
    %21 = arith.truncf %20 : vector<8x128xf32> to vector<8x128xbf16>
    %c0_13 = arith.constant 0 : index
    %c0_14 = arith.constant 0 : index
    %22 = vector.load %arg6[%c0_13, %c0_14] : memref<8x128xbf16, #tpu.memory_space<vmem>>, vector<8x128xbf16>
    tpu.vector_store %arg6[%c0_13, %c0_14], %21 {strides = array<i32>} : memref<8x128xbf16, #tpu.memory_space<vmem>>, vector<8x128xbf16>,
    return
  }
  func.func @transform_0(%arg0: i32) -> (i32, i32) {
    %c0_i32 = arith.constant 0 : i32
    %c0_i32_0 = arith.constant 0 : i32
    return %arg0, %c0_i32 : i32, i32
  }
  func.func @transform_1(%arg0: i32) -> (i32, i32) {
    %c0_i32 = arith.constant 0 : i32
    %c0_i32_0 = arith.constant 0 : i32
    %c0_i32_1 = arith.constant 0 : i32
    return %c0_i32, %c0_i32_0 : i32, i32
  }
  func.func @transform_2(%arg0: i32) -> (i32, i32) {
    %c0_i32 = arith.constant 0 : i32
    %c0_i32_0 = arith.constant 0 : i32
    %c0_i32_1 = arith.constant 0 : i32
    return %c0_i32, %c0_i32_0 : i32, i32
  }
  func.func @transform_3(%arg0: i32) -> (i32, i32) {
    %c0_i32 = arith.constant 0 : i32
    %c0_i32_0 = arith.constant 0 : i32
    %c0_i32_1 = arith.constant 0 : i32
    return %c0_i32, %c0_i32_0 : i32, i32
  }
  func.func @transform_4(%arg0: i32) -> (i32, i32) {
    %c0_i32 = arith.constant 0 : i32
    %c0_i32_0 = arith.constant 0 : i32
    %c0_i32_1 = arith.constant 0 : i32
    return %c0_i32, %c0_i32_0 : i32, i32
  }
  func.func @transform_5(%arg0: i32) -> (i32, i32) {
    %c0_i32 = arith.constant 0 : i32
    %c0_i32_0 = arith.constant 0 : i32
    return %arg0, %c0_i32 : i32, i32
  }
}

module attributes {stable_mosaic.version = 11 : i64} {
  func.func @actor_kernel(%arg0: i32, %arg1: memref<8x32xbf16, #tpu.memory_space<vmem>>, %arg2: memref<32x640xbf16, #tpu.memory_space<vmem>>, %arg3: memref<256x256xbf16, #tpu.memory_space<vmem>>, %arg4: memref<256x128xbf16, #tpu.memory_space<vmem>>, %arg5: memref<1x640xf32, #tpu.memory_space<vmem>>, %arg6: memref<8x128xbf16, #tpu.memory_space<vmem>>) attributes {dimension_semantics = [#tpu.dimension_semantics<parallel>], iteration_bounds = array<i64: 1>, scalar_prefetch = 0 : i64, scratch_operands = 0 : i64, tpu.core_type = #tpu.core_type<tc>, window_params = [{transform_indices = @transform_0, window_bounds = array<i64: 8, 32>}, {pipeline_mode = #tpu.pipeline_mode<synchronous>, transform_indices = @transform_1, window_bounds = array<i64: 32, 640>}, {pipeline_mode = #tpu.pipeline_mode<synchronous>, transform_indices = @transform_2, window_bounds = array<i64: 256, 256>}, {pipeline_mode = #tpu.pipeline_mode<synchronous>, transform_indices = @transform_3, window_bounds = array<i64: 256, 128>}, {pipeline_mode = #tpu.pipeline_mode<synchronous>, transform_indices = @transform_4, window_bounds = array<i64: 1, 640>}, {transform_indices = @transform_5, window_bounds = array<i64: 8, 128>}]} {
    %c0 = arith.constant 0 : index
    %c0_0 = arith.constant 0 : index
    %0 = vector.load %arg1[%c0, %c0_0] : memref<8x32xbf16, #tpu.memory_space<vmem>>, vector<8x32xbf16>
    %c0_1 = arith.constant 0 : index
    %c0_2 = arith.constant 0 : index
    %1 = vector.load %arg2[%c0_1, %c0_2] : memref<32x640xbf16, #tpu.memory_space<vmem>>, vector<32x640xbf16>
    %cst = arith.constant dense<0.000000e+00> : vector<8x640xf32>
    %2 = tpu.matmul %0, %1, %cst {dimension_numbers = #tpu.dot_dimension_numbers<[1], [0], [0], [1], [0, 0, 1, 1], [], []>} : vector<8x32xbf16>, vector<32x640xbf16>, vector<8x640xf32> -> vector<8x640xf32>
    %c0_3 = arith.constant 0 : index
    %c0_4 = arith.constant 0 : index
    %3 = vector.load %arg5[%c0_3, %c0_4] : memref<1x640xf32, #tpu.memory_space<vmem>>, vector<1x640xf32>
    %4 = vector.broadcast %3 : vector<1x640xf32> to vector<8x640xf32>
    %5 = arith.addf %2, %4 : vector<8x640xf32>
    %6 = vector.extract_strided_slice %5 {offsets = [0, 0], sizes = [8, 256], strides = [1, 1]} : vector<8x640xf32> to vector<8x256xf32>
    %cst_5 = arith.constant 0.000000e+00 : f32
    %7 = vector.broadcast %cst_5 : f32 to vector<8x256xf32>
    %8 = arith.maximumf %6, %7 : vector<8x256xf32>
    %9 = arith.truncf %8 : vector<8x256xf32> to vector<8x256xbf16>
    %c0_6 = arith.constant 0 : index
    %c0_7 = arith.constant 0 : index
    %10 = vector.load %arg3[%c0_6, %c0_7] : memref<256x256xbf16, #tpu.memory_space<vmem>>, vector<256x256xbf16>
    %cst_8 = arith.constant dense<0.000000e+00> : vector<8x256xf32>
    %11 = tpu.matmul %9, %10, %cst_8 {dimension_numbers = #tpu.dot_dimension_numbers<[1], [0], [0], [1], [0, 0, 1, 1], [], []>} : vector<8x256xbf16>, vector<256x256xbf16>, vector<8x256xf32> -> vector<8x256xf32>
    %12 = vector.extract_strided_slice %5 {offsets = [0, 256], sizes = [8, 256], strides = [1, 1]} : vector<8x640xf32> to vector<8x256xf32>
    %13 = arith.addf %11, %12 : vector<8x256xf32>
    %cst_9 = arith.constant 0.000000e+00 : f32
    %14 = vector.broadcast %cst_9 : f32 to vector<8x256xf32>
    %15 = arith.maximumf %13, %14 : vector<8x256xf32>
    %16 = arith.truncf %15 : vector<8x256xf32> to vector<8x256xbf16>
    %c0_10 = arith.constant 0 : index
    %c0_11 = arith.constant 0 : index
    %17 = vector.load %arg4[%c0_10, %c0_11] : memref<256x128xbf16, #tpu.memory_space<vmem>>, vector<256x128xbf16>
    %cst_12 = arith.constant dense<0.000000e+00> : vector<8x128xf32>
    %18 = tpu.matmul %16, %17, %cst_12 {dimension_numbers = #tpu.dot_dimension_numbers<[1], [0], [0], [1], [0, 0, 1, 1], [], []>} : vector<8x256xbf16>, vector<256x128xbf16>, vector<8x128xf32> -> vector<8x128xf32>
    %19 = vector.extract_strided_slice %5 {offsets = [0, 512], sizes = [8, 128], strides = [1, 1]} : vector<8x640xf32> to vector<8x128xf32>
    %20 = arith.addf %18, %19 : vector<8x128xf32>
    %21 = arith.truncf %20 : vector<8x128xf32> to vector<8x128xbf16>
    %c0_13 = arith.constant 0 : index
    %c0_14 = arith.constant 0 : index
    %22 = vector.load %arg6[%c0_13, %c0_14] : memref<8x128xbf16, #tpu.memory_space<vmem>>, vector<8x128xbf16>
    tpu.vector_store %arg6[%c0_13, %c0_14], %21 {strides = array<i32>} : memref<8x128xbf16, #tpu.memory_space<vmem>>, vector<8x128xbf16>,
    return
  }
  func.func @transform_0(%arg0: i32) -> (i32, i32) {
    %c0_i32 = arith.constant 0 : i32
    %c0_i32_0 = arith.constant 0 : i32
    return %arg0, %c0_i32 : i32, i32
  }
  func.func @transform_1(%arg0: i32) -> (i32, i32) {
    %c0_i32 = arith.constant 0 : i32
    %c0_i32_0 = arith.constant 0 : i32
    %c0_i32_1 = arith.constant 0 : i32
    return %c0_i32, %c0_i32_0 : i32, i32
  }
  func.func @transform_2(%arg0: i32) -> (i32, i32) {
    %c0_i32 = arith.constant 0 : i32
    %c0_i32_0 = arith.constant 0 : i32
    %c0_i32_1 = arith.constant 0 : i32
    return %c0_i32, %c0_i32_0 : i32, i32
  }
  func.func @transform_3(%arg0: i32) -> (i32, i32) {
    %c0_i32 = arith.constant 0 : i32
    %c0_i32_0 = arith.constant 0 : i32
    %c0_i32_1 = arith.constant 0 : i32
    return %c0_i32, %c0_i32_0 : i32, i32
  }
  func.func @transform_4(%arg0: i32) -> (i32, i32) {
    %c0_i32 = arith.constant 0 : i32
    %c0_i32_0 = arith.constant 0 : i32
    %c0_i32_1 = arith.constant 0 : i32
    return %c0_i32, %c0_i32_0 : i32, i32
  }
  func.func @transform_5(%arg0: i32) -> (i32, i32) {
    %c0_i32 = arith.constant 0 : i32
    %c0_i32_0 = arith.constant 0 : i32
    return %arg0, %c0_i32 : i32, i32
  }
}

</mosaic_0001>

<llo_original>
// kernel: tpu_custom_call.1
$region0: #{tpu_custom_call.1}
  #allocation0 [shape = 'u32[]', space=smem, size = 0x4, offset = 0x4, fixed_abs, tag = 'smem constant byte address 0x4 - core index']
  #allocation1 [shape = 'u32[144,128]{1,0:T(1,128)}', space=vmem, size = 0x12000, scoped, tag = 'internal scratch']
  %s0 = inlined_call_operand.hbm [shape: bf16[8,32], index: 0, kind: input, shape index: {}]
  %s1 = inlined_call_operand.hbm [shape: bf16[32,640], index: 1, kind: input, shape index: {}]
  %s2 = inlined_call_operand.hbm [shape: bf16[256,256], index: 2, kind: input, shape index: {}]
  %s3 = inlined_call_operand.hbm [shape: bf16[256,128], index: 3, kind: input, shape index: {}]
  %s4 = inlined_call_operand.vmem [shape: f32[1,640], index: 4, kind: input, shape index: {}]
  %s5 = inlined_call_operand.hbm [shape: bf16[8,128], index: 5, kind: output, shape index: {}]
  %s6 = sld [smem:[#allocation0]]
  $region46: #{tpu_custom_call.1} parent=0
    _
  %s8 = ssub.s32 1, %s6
  %s9 = scalar_select 0, %s8, %s6
  $region1: #{tpu_custom_call.1} parent=0
    #allocation2 [shape = 'u8[2048]{0}', space=vmem, size = 0x800, scoped, tag = 'input window, operand 0, single buffered']
    #allocation3 [shape = 's32[1]{0}', space=sflag, size = 0x4, scoped, tag = 'scoped memory for tpu_custom_call.1']
    #allocation4 [shape = 's32[1]{0}', space=sflag, size = 0x4, scoped, tag = 'scoped memory for tpu_custom_call.1']
    #allocation5 [shape = 'u8[40960]{0}', space=vmem, size = 0xa000, scoped, tag = 'input window, operand 1, single buffered']
    #allocation6 [shape = 's32[1]{0}', space=sflag, size = 0x4, scoped, tag = 'scoped memory for tpu_custom_call.1']
    #allocation7 [shape = 'u8[131072]{0}', space=vmem, size = 0x20000, scoped, tag = 'input window, operand 2, single buffered']
    #allocation8 [shape = 'u8[65536]{0}', space=vmem, size = 0x10000, scoped, tag = 'input window, operand 3, single buffered']
    #allocation9 [shape = 's32[1]{0}', space=sflag, size = 0x4, scoped, tag = 'scoped memory for tpu_custom_call.1']
    #allocation10 [shape = 'u8[2048]{0}', space=vmem, size = 0x800, scoped, tag = 'output window, operand 0, single buffered']
    %10 = vsyncpa [#allocation3], 0
    %11 = vsyncpa [#allocation6], 0
    %12 = vsyncpa [#allocation9], 0
    %13 = vsyncpa [#allocation4], 0
    // Predicated region
    $region2: #{tpu_custom_call.1} parent=1 // pred_check
      _
    $region3: #{tpu_custom_call.1} parent=1 // pred_check_branch
      %15 = sbr.rel (0) target = $region5
    $region4: #{tpu_custom_call.1} parent=1 // pred_region
      %s17 = ssub.s32 64, 64
      %18 = vsyncadd [#allocation3], %s17
      %s20 = sshll.u32 [#allocation2], 4
      %s21 = int_to_ptr.vmem [resolvable:$true] %s20
      %23 = dma.hbm_to_vmem [thread:$0]  %s0, 64, %s21, [#allocation3]
    $region5: #{tpu_custom_call.1} parent=1 // pred_fallthru
      _
    // Predicated region
    $region6: #{tpu_custom_call.1} parent=1 // pred_check
      _
    $region7: #{tpu_custom_call.1} parent=1 // pred_check_branch
      %25 = sbr.rel (0) target = $region9
    $region8: #{tpu_custom_call.1} parent=1 // pred_region
      %s27 = ssub.s32 1280, 1280
      %28 = vsyncadd [#allocation6], %s27
      %s29 = sshll.u32 [#allocation5], 4
      %s30 = int_to_ptr.vmem [resolvable:$true] %s29
      %35 = dma.hbm_to_vmem [thread:$0]  %s1, 1280, %s30, [#allocation6], 320, 320, 20
    $region9: #{tpu_custom_call.1} parent=1 // pred_fallthru
      _
    // Predicated region
    $region10: #{tpu_custom_call.1} parent=1 // pred_check
      _
    $region11: #{tpu_custom_call.1} parent=1 // pred_check_branch
      %37 = sbr.rel (0) target = $region13
    $region12: #{tpu_custom_call.1} parent=1 // pred_region
      %s39 = ssub.s32 4096, 4096
      %40 = vsyncadd [#allocation6], %s39
      %s41 = sshll.u32 [#allocation7], 4
      %s42 = int_to_ptr.vmem [resolvable:$true] %s41
      %47 = dma.hbm_to_vmem [thread:$0]  %s2, 4096, %s42, [#allocation6], 128, 128, 8
    $region13: #{tpu_custom_call.1} parent=1 // pred_fallthru
      _
    // Predicated region
    $region14: #{tpu_custom_call.1} parent=1 // pred_check
      _
    $region15: #{tpu_custom_call.1} parent=1 // pred_check_branch
      %49 = sbr.rel (0) target = $region17
    $region16: #{tpu_custom_call.1} parent=1 // pred_region
      %s51 = ssub.s32 2048, 2048
      %52 = vsyncadd [#allocation9], %s51
      %s53 = sshll.u32 [#allocation8], 4
      %s54 = int_to_ptr.vmem [resolvable:$true] %s53
      %59 = dma.hbm_to_vmem [thread:$0]  %s3, 2048, %s54, [#allocation9], 64, 64, 4
    $region17: #{tpu_custom_call.1} parent=1 // pred_fallthru
      _
    // Predicated region
    $region18: #{tpu_custom_call.1} parent=1 // pred_check
      _
    $region19: #{tpu_custom_call.1} parent=1 // pred_check_branch
      %61 = sbr.rel (0) target = $region21
    $region20: #{tpu_custom_call.1} parent=1 // pred_region
      _
    $region21: #{tpu_custom_call.1} parent=1 // pred_fallthru
      _
    // Predicated region
    $region22: #{tpu_custom_call.1} parent=1 // pred_check
      _
    $region23: #{tpu_custom_call.1} parent=1 // pred_check_branch
      %63 = sbr.rel (0) target = $region25
    $region24: #{tpu_custom_call.1} parent=1 // pred_region
      %64 = dma.done [#allocation3], 64
    $region25: #{tpu_custom_call.1} parent=1 // pred_fallthru
      _
    // Predicated region
    $region26: #{tpu_custom_call.1} parent=1 // pred_check
      _
    $region27: #{tpu_custom_call.1} parent=1 // pred_check_branch
      %66 = sbr.rel (0) target = $region29
    $region28: #{tpu_custom_call.1} parent=1 // pred_region
      %67 = dma.done [#allocation6], 1280
    $region29: #{tpu_custom_call.1} parent=1 // pred_fallthru
      _
    // Predicated region
    $region30: #{tpu_custom_call.1} parent=1 // pred_check
      _
    $region31: #{tpu_custom_call.1} parent=1 // pred_check_branch
      %69 = sbr.rel (0) target = $region33
    $region32: #{tpu_custom_call.1} parent=1 // pred_region
      %70 = dma.done [#allocation6], 4096
    $region33: #{tpu_custom_call.1} parent=1 // pred_fallthru
      _
    // Predicated region
    $region34: #{tpu_custom_call.1} parent=1 // pred_check
      _
    $region35: #{tpu_custom_call.1} parent=1 // pred_check_branch
      %72 = sbr.rel (0) target = $region37
    $region36: #{tpu_custom_call.1} parent=1 // pred_region
      %73 = dma.done [#allocation9], 2048
    $region37: #{tpu_custom_call.1} parent=1 // pred_fallthru
      _
    %v75 = vld [vmem:[#allocation2] sm:$0xf]
    %v76 = vld [vmem:[#allocation5] sm:$0xff]
    %v77 = vld [vmem:[#allocation5 + $0x8] sm:$0xff]
    %v78 = vld [vmem:[#allocation5 + $0x10] sm:$0xf]
    %v79 = vld [vmem:[#allocation5 + $0x14] sm:$0xff]
    %v80 = vld [vmem:[#allocation5 + $0x1c] sm:$0xff]
    %v81 = vld [vmem:[#allocation5 + $0x24] sm:$0xf]
    %v82 = vld [vmem:[#allocation5 + $0x28] sm:$0xff]
    %v83 = vld [vmem:[#allocation5 + $0x30] sm:$0xff]
    %v84 = vld [vmem:[#allocation5 + $0x38] sm:$0xf]
    %v85 = vld [vmem:[#allocation5 + $0x3c] sm:$0xff]
    %v86 = vld [vmem:[#allocation5 + $0x44] sm:$0xff]
    %v87 = vld [vmem:[#allocation5 + $0x4c] sm:$0xf]
    %v88 = vld [vmem:[%s4] sm:$0x1f]
    %v90 = vlaneseq
    %v91 = vshrl.u32 %v90, 7
    %v92 = vsub.s32 0, %v91
    %v93 = vrot.slane %v88, %v92
    %v94 = vlaneseq
    %v95 = vshrl.u32 %v94, 7
    %v96 = vsub.s32 1, %v95
    %v97 = vrot.slane %v88, %v96
    %v98 = vlaneseq
    %v99 = vshrl.u32 %v98, 7
    %v100 = vsub.s32 2, %v99
    %v101 = vrot.slane %v88, %v100
    %v102 = vlaneseq
    %v103 = vshrl.u32 %v102, 7
    %v104 = vsub.s32 3, %v103
    %v105 = vrot.slane %v88, %v104
    %v106 = vlaneseq
    %v107 = vshrl.u32 %v106, 7
    %v108 = vsub.s32 4, %v107
    %v109 = vrot.slane %v88, %v108
    %v127 = vunpack.c.l.b16 %v76
    %v128 = vunpack.c.h.b16 %v76
    %v129 = vunpack.c.l.b16 %v77
    %v130 = vunpack.c.h.b16 %v77
    %v131 = vunpack.c.l.b16 %v78
    %v132 = vunpack.c.l.b16 %v79
    %v133 = vunpack.c.h.b16 %v79
    %v134 = vunpack.c.l.b16 %v80
    %v135 = vunpack.c.h.b16 %v80
    %v136 = vunpack.c.l.b16 %v81
    %v137 = vunpack.c.l.b16 %v82
    %v138 = vunpack.c.h.b16 %v82
    %v139 = vunpack.c.l.b16 %v83
    %v140 = vunpack.c.h.b16 %v83
    %v141 = vunpack.c.l.b16 %v84
    %v142 = vunpack.c.l.b16 %v85
    %v143 = vunpack.c.h.b16 %v85
    %v144 = vunpack.c.l.b16 %v86
    %v145 = vunpack.c.h.b16 %v86
    %v146 = vunpack.c.l.b16 %v87
    %v147 = vpack.c.b16 %v132, %v127
    %v148 = vpack.c.b16 %v133, %v128
    %v149 = vpack.c.b16 %v134, %v129
    %v150 = vpack.c.b16 %v135, %v130
    %v151 = vpack.c.b16 %v136, %v131
    %v152 = vpack.c.b16 %v142, %v137
    %v153 = vpack.c.b16 %v143, %v138
    %v154 = vpack.c.b16 %v144, %v139
    %v155 = vpack.c.b16 %v145, %v140
    %v156 = vpack.c.b16 %v146, %v141
    %vm167 = vcmask 261120
    %v169 = vsel %vm167, %v75, 0
    %171 = vmatprep.subr.bf16.mxu0 %v148
    %172 = vmatpush1.bf16.msra.mxu0 %v147
    %173 = vmatprep.subr.bf16.mxu0 %v153
    %174 = vmatpush1.bf16.msra.mxu0 %v152
    %175 = vmatprep.subr.bf16.mxu0 0
    %176 = vmatpush1.bf16.msra.mxu0 0
    %177 = vmatprep.subr.bf16.mxu0 0
    %178 = vmatpush1.bf16.msra.mxu0 0
    %179 = vmatprep.subr.bf16.mxu0 0
    %180 = vmatpush1.bf16.msra.mxu0 0
    %181 = vmatprep.subr.bf16.mxu0 0
    %182 = vmatpush1.bf16.msra.mxu0 0
    %183 = vmatprep.subr.bf16.mxu0 0
    %184 = vmatpush1.bf16.msra.mxu0 0
    %185 = vmatprep.subr.bf16.mxu0 0
    %186 = vmatpush1.bf16.msra.mxu0 0
    %187 = vmatprep.subr.bf16.mxu0 0
    %188 = vmatpush1.bf16.msra.mxu0 0
    %189 = vmatprep.subr.bf16.mxu0 0
    %190 = vmatpush1.bf16.msra.mxu0 0
    %191 = vmatprep.subr.bf16.mxu0 0
    %192 = vmatpush1.bf16.msra.mxu0 0
    %193 = vmatprep.subr.bf16.mxu0 0
    %194 = vmatpush1.bf16.msra.mxu0 0
    %195 = vmatprep.subr.bf16.mxu0 0
    %196 = vmatpush1.bf16.msra.mxu0 0
    %197 = vmatprep.subr.bf16.mxu0 0
    %198 = vmatpush1.bf16.msra.mxu0 0
    %199 = vmatprep.subr.bf16.mxu0 0
    %200 = vmatpush1.bf16.msra.mxu0 0
    %201 = vmatprep.subr.bf16.mxu0 0
    %202 = vmatpush1.bf16.msra.mxu0 0
    %203 = vmatprep.mubr.bf16.mxu0 0
    %204 = vmatmul.mubr.bf16.gmra.mrb[0].mxu0 %v169
    %v205 = vpop.f32.mrb[0].mxu0
    %v206 = vadd.f32 %v93, %v205
    %v207 = vpop.f32.mrb[0].mxu0
    %v208 = vadd.f32 %v97, %v207
    %v209 = vpop.f32.mrb[0].mxu0
    %v210 = vpop.f32.mrb[0].mxu0
    %211 = vdwg.mxu0
    %212 = vmatprep.subr.bf16.mxu0 %v150
    %213 = vmatpush1.bf16.msra.mxu0 %v149
    %214 = vmatprep.subr.bf16.mxu0 %v155
    %215 = vmatpush1.bf16.msra.mxu0 %v154
    %216 = vmatprep.subr.bf16.mxu0 0
    %217 = vmatpush1.bf16.msra.mxu0 0
    %218 = vmatprep.subr.bf16.mxu0 0
    %219 = vmatpush1.bf16.msra.mxu0 0
    %220 = vmatprep.subr.bf16.mxu0 0
    %221 = vmatpush1.bf16.msra.mxu0 0
    %222 = vmatprep.subr.bf16.mxu0 0
    %223 = vmatpush1.bf16.msra.mxu0 0
    %224 = vmatprep.subr.bf16.mxu0 0
    %225 = vmatpush1.bf16.msra.mxu0 0
    %226 = vmatprep.subr.bf16.mxu0 0
    %227 = vmatpush1.bf16.msra.mxu0 0
    %228 = vmatprep.subr.bf16.mxu0 0
    %229 = vmatpush1.bf16.msra.mxu0 0
    %230 = vmatprep.subr.bf16.mxu0 0
    %231 = vmatpush1.bf16.msra.mxu0 0
    %232 = vmatprep.subr.bf16.mxu0 0
    %233 = vmatpush1.bf16.msra.mxu0 0
    %234 = vmatprep.subr.bf16.mxu0 0
    %235 = vmatpush1.bf16.msra.mxu0 0
    %236 = vmatprep.subr.bf16.mxu0 0
    %237 = vmatpush1.bf16.msra.mxu0 0
    %238 = vmatprep.subr.bf16.mxu0 0
    %239 = vmatpush1.bf16.msra.mxu0 0
    %240 = vmatprep.subr.bf16.mxu0 0
    %241 = vmatpush1.bf16.msra.mxu0 0
    %242 = vmatprep.subr.bf16.mxu0 0
    %243 = vmatpush1.bf16.msra.mxu0 0
    %244 = vmatprep.mubr.bf16.mxu0 0
    %245 = vmatmul.mubr.bf16.gmra.mrb[0].mxu0 %v169
    %v246 = vpop.f32.mrb[0].mxu0
    %v247 = vadd.f32 %v101, %v246
    %v248 = vpop.f32.mrb[0].mxu0
    %v249 = vadd.f32 %v105, %v248
    %v250 = vpop.f32.mrb[0].mxu0
    %v251 = vpop.f32.mrb[0].mxu0
    %252 = vdwg.mxu0
    %253 = vmatprep.subr.bf16.mxu0 0
    %254 = vmatpush1.bf16.msra.mxu0 %v151
    %255 = vmatprep.subr.bf16.mxu0 0
    %256 = vmatpush1.bf16.msra.mxu0 %v156
    %257 = vmatprep.subr.bf16.mxu0 0
    %258 = vmatpush1.bf16.msra.mxu0 0
    %259 = vmatprep.subr.bf16.mxu0 0
    %260 = vmatpush1.bf16.msra.mxu0 0
    %261 = vmatprep.subr.bf16.mxu0 0
    %262 = vmatpush1.bf16.msra.mxu0 0
    %263 = vmatprep.subr.bf16.mxu0 0
    %264 = vmatpush1.bf16.msra.mxu0 0
    %265 = vmatprep.subr.bf16.mxu0 0
    %266 = vmatpush1.bf16.msra.mxu0 0
    %267 = vmatprep.subr.bf16.mxu0 0
    %268 = vmatpush1.bf16.msra.mxu0 0
    %269 = vmatprep.subr.bf16.mxu0 0
    %270 = vmatpush1.bf16.msra.mxu0 0
    %271 = vmatprep.subr.bf16.mxu0 0
    %272 = vmatpush1.bf16.msra.mxu0 0
    %273 = vmatprep.subr.bf16.mxu0 0
    %274 = vmatpush1.bf16.msra.mxu0 0
    %275 = vmatprep.subr.bf16.mxu0 0
    %276 = vmatpush1.bf16.msra.mxu0 0
    %277 = vmatprep.subr.bf16.mxu0 0
    %278 = vmatpush1.bf16.msra.mxu0 0
    %279 = vmatprep.subr.bf16.mxu0 0
    %280 = vmatpush1.bf16.msra.mxu0 0
    %281 = vmatprep.subr.bf16.mxu0 0
    %282 = vmatpush1.bf16.msra.mxu0 0
    %283 = vmatprep.subr.bf16.mxu0 0
    %284 = vmatpush1.bf16.msra.mxu0 0
    %285 = vmatprep.mubr.bf16.mxu0 0
    %286 = vmatmul.mubr.bf16.gmra.mrb[0].mxu0 %v169
    %v287 = vpop.f32.mrb[0].mxu0
    %v288 = vadd.f32 %v109, %v287
    %v289 = vpop.f32.mrb[0].mxu0
    %v290 = vpop.f32.mrb[0].mxu0
    %v291 = vpop.f32.mrb[0].mxu0
    %292 = vdwg.mxu0
    %v293 = vmax.f32 %v206, 0.0
    %v294 = vmax.f32 %v208, 0.0
    %v295 = vpack.c.bf16 %v293, %v293
    %v296 = vpack.c.bf16 %v294, %v294
    %v297 = vld [vmem:[#allocation7] sm:$0xff]
    %v298 = vld [vmem:[#allocation7 + $0x8] sm:$0xff]
    %v299 = vld [vmem:[#allocation7 + $0x10] sm:$0xff]
    %v300 = vld [vmem:[#allocation7 + $0x18] sm:$0xff]
    %v301 = vld [vmem:[#allocation7 + $0x20] sm:$0xff]
    %v302 = vld [vmem:[#allocation7 + $0x28] sm:$0xff]
    %v303 = vld [vmem:[#allocation7 + $0x30] sm:$0xff]
    %v304 = vld [vmem:[#allocation7 + $0x38] sm:$0xff]
    %v305 = vld [vmem:[#allocation7 + $0x40] sm:$0xff]
    %v306 = vld [vmem:[#allocation7 + $0x48] sm:$0xff]
    %v307 = vld [vmem:[#allocation7 + $0x50] sm:$0xff]
    %v308 = vld [vmem:[#allocation7 + $0x58] sm:$0xff]
    %v309 = vld [vmem:[#allocation7 + $0x60] sm:$0xff]
    %v310 = vld [vmem:[#allocation7 + $0x68] sm:$0xff]
    %v311 = vld [vmem:[#allocation7 + $0x70] sm:$0xff]
    %v312 = vld [vmem:[#allocation7 + $0x78] sm:$0xff]
    %v313 = vld [vmem:[#allocation7 + $0x80] sm:$0xff]
    %v314 = vld [vmem:[#allocation7 + $0x88] sm:$0xff]
    %v315 = vld [vmem:[#allocation7 + $0x90] sm:$0xff]
    %v316 = vld [vmem:[#allocation7 + $0x98] sm:$0xff]
    %v317 = vld [vmem:[#allocation7 + $0xa0] sm:$0xff]
    %v318 = vld [vmem:[#allocation7 + $0xa8] sm:$0xff]
    %v319 = vld [vmem:[#allocation7 + $0xb0] sm:$0xff]
    %v320 = vld [vmem:[#allocation7 + $0xb8] sm:$0xff]
    %v321 = vld [vmem:[#allocation7 + $0xc0] sm:$0xff]
    %v322 = vld [vmem:[#allocation7 + $0xc8] sm:$0xff]
    %v323 = vld [vmem:[#allocation7 + $0xd0] sm:$0xff]
    %v324 = vld [vmem:[#allocation7 + $0xd8] sm:$0xff]
    %v325 = vld [vmem:[#allocation7 + $0xe0] sm:$0xff]
    %v326 = vld [vmem:[#allocation7 + $0xe8] sm:$0xff]
    %v327 = vld [vmem:[#allocation7 + $0xf0] sm:$0xff]
    %v328 = vld [vmem:[#allocation7 + $0xf8] sm:$0xff]
    %v361 = vunpack.c.l.b16 %v297
    %v362 = vunpack.c.h.b16 %v297
    %v363 = vunpack.c.l.b16 %v298
    %v364 = vunpack.c.h.b16 %v298
    %v365 = vunpack.c.l.b16 %v299
    %v366 = vunpack.c.h.b16 %v299
    %v367 = vunpack.c.l.b16 %v300
    %v368 = vunpack.c.h.b16 %v300
    %v369 = vunpack.c.l.b16 %v301
    %v370 = vunpack.c.h.b16 %v301
    %v371 = vunpack.c.l.b16 %v302
    %v372 = vunpack.c.h.b16 %v302
    %v373 = vunpack.c.l.b16 %v303
    %v374 = vunpack.c.h.b16 %v303
    %v375 = vunpack.c.l.b16 %v304
    %v376 = vunpack.c.h.b16 %v304
    %v377 = vunpack.c.l.b16 %v305
    %v378 = vunpack.c.h.b16 %v305
    %v379 = vunpack.c.l.b16 %v306
    %v380 = vunpack.c.h.b16 %v306
    %v381 = vunpack.c.l.b16 %v307
    %v382 = vunpack.c.h.b16 %v307
    %v383 = vunpack.c.l.b16 %v308
    %v384 = vunpack.c.h.b16 %v308
    %v385 = vunpack.c.l.b16 %v309
    %v386 = vunpack.c.h.b16 %v309
    %v387 = vunpack.c.l.b16 %v310
    %v388 = vunpack.c.h.b16 %v310
    %v389 = vunpack.c.l.b16 %v311
    %v390 = vunpack.c.h.b16 %v311
    %v391 = vunpack.c.l.b16 %v312
    %v392 = vunpack.c.h.b16 %v312
    %v393 = vunpack.c.l.b16 %v313
    %v394 = vunpack.c.h.b16 %v313
    %v395 = vunpack.c.l.b16 %v314
    %v396 = vunpack.c.h.b16 %v314
    %v397 = vunpack.c.l.b16 %v315
    %v398 = vunpack.c.h.b16 %v315
    %v399 = vunpack.c.l.b16 %v316
    %v400 = vunpack.c.h.b16 %v316
    %v401 = vunpack.c.l.b16 %v317
    %v402 = vunpack.c.h.b16 %v317
    %v403 = vunpack.c.l.b16 %v318
    %v404 = vunpack.c.h.b16 %v318
    %v405 = vunpack.c.l.b16 %v319
    %v406 = vunpack.c.h.b16 %v319
    %v407 = vunpack.c.l.b16 %v320
    %v408 = vunpack.c.h.b16 %v320
    %v409 = vunpack.c.l.b16 %v321
    %v410 = vunpack.c.h.b16 %v321
    %v411 = vunpack.c.l.b16 %v322
    %v412 = vunpack.c.h.b16 %v322
    %v413 = vunpack.c.l.b16 %v323
    %v414 = vunpack.c.h.b16 %v323
    %v415 = vunpack.c.l.b16 %v324
    %v416 = vunpack.c.h.b16 %v324
    %v417 = vunpack.c.l.b16 %v325
    %v418 = vunpack.c.h.b16 %v325
    %v419 = vunpack.c.l.b16 %v326
    %v420 = vunpack.c.h.b16 %v326
    %v421 = vunpack.c.l.b16 %v327
    %v422 = vunpack.c.h.b16 %v327
    %v423 = vunpack.c.l.b16 %v328
    %v424 = vunpack.c.h.b16 %v328
    %v425 = vpack.c.b16 %v363, %v361
    %v426 = vpack.c.b16 %v364, %v362
    %v427 = vpack.c.b16 %v367, %v365
    %v428 = vpack.c.b16 %v368, %v366
    %v429 = vpack.c.b16 %v371, %v369
    %v430 = vpack.c.b16 %v372, %v370
    %v431 = vpack.c.b16 %v375, %v373
    %v432 = vpack.c.b16 %v376, %v374
    %v433 = vpack.c.b16 %v379, %v377
    %v434 = vpack.c.b16 %v380, %v378
    %v435 = vpack.c.b16 %v383, %v381
    %v436 = vpack.c.b16 %v384, %v382
    %v437 = vpack.c.b16 %v387, %v385
    %v438 = vpack.c.b16 %v388, %v386
    %v439 = vpack.c.b16 %v391, %v389
    %v440 = vpack.c.b16 %v392, %v390
    %v441 = vpack.c.b16 %v395, %v393
    %v442 = vpack.c.b16 %v396, %v394
    %v443 = vpack.c.b16 %v399, %v397
    %v444 = vpack.c.b16 %v400, %v398
    %v445 = vpack.c.b16 %v403, %v401
    %v446 = vpack.c.b16 %v404, %v402
    %v447 = vpack.c.b16 %v407, %v405
    %v448 = vpack.c.b16 %v408, %v406
    %v449 = vpack.c.b16 %v411, %v409
    %v450 = vpack.c.b16 %v412, %v410
    %v451 = vpack.c.b16 %v415, %v413
    %v452 = vpack.c.b16 %v416, %v414
    %v453 = vpack.c.b16 %v419, %v417
    %v454 = vpack.c.b16 %v420, %v418
    %v455 = vpack.c.b16 %v423, %v421
    %v456 = vpack.c.b16 %v424, %v422
    %489 = vmatprep.subr.bf16.mxu0 %v426
    %490 = vmatpush1.bf16.msra.mxu0 %v425
    %491 = vmatprep.subr.bf16.mxu0 %v428
    %492 = vmatpush1.bf16.msra.mxu0 %v427
    %493 = vmatprep.subr.bf16.mxu0 %v430
    %494 = vmatpush1.bf16.msra.mxu0 %v429
    %495 = vmatprep.subr.bf16.mxu0 %v432
    %496 = vmatpush1.bf16.msra.mxu0 %v431
    %497 = vmatprep.subr.bf16.mxu0 %v434
    %498 = vmatpush1.bf16.msra.mxu0 %v433
    %499 = vmatprep.subr.bf16.mxu0 %v436
    %500 = vmatpush1.bf16.msra.mxu0 %v435
    %501 = vmatprep.subr.bf16.mxu0 %v438
    %502 = vmatpush1.bf16.msra.mxu0 %v437
    %503 = vmatprep.subr.bf16.mxu0 %v440
    %504 = vmatpush1.bf16.msra.mxu0 %v439
    %505 = vmatprep.subr.bf16.mxu0 %v442
    %506 = vmatpush1.bf16.msra.mxu0 %v441
    %507 = vmatprep.subr.bf16.mxu0 %v444
    %508 = vmatpush1.bf16.msra.mxu0 %v443
    %509 = vmatprep.subr.bf16.mxu0 %v446
    %510 = vmatpush1.bf16.msra.mxu0 %v445
    %511 = vmatprep.subr.bf16.mxu0 %v448
    %512 = vmatpush1.bf16.msra.mxu0 %v447
    %513 = vmatprep.subr.bf16.mxu0 %v450
    %514 = vmatpush1.bf16.msra.mxu0 %v449
    %515 = vmatprep.subr.bf16.mxu0 %v452
    %516 = vmatpush1.bf16.msra.mxu0 %v451
    %517 = vmatprep.subr.bf16.mxu0 %v454
    %518 = vmatpush1.bf16.msra.mxu0 %v453
    %519 = vmatprep.subr.bf16.mxu0 %v456
    %520 = vmatpush1.bf16.msra.mxu0 %v455
    %521 = vmatprep.mubr.bf16.mxu0 %v296
    %522 = vmatmul.mubr.bf16.gmra.mrb[0].mxu0 %v295
    %v523 = vpop.f32.mrb[0].mxu0
    %v524 = vadd.f32 %v247, %v523
    %v525 = vpop.f32.mrb[0].mxu0
    %v526 = vadd.f32 %v249, %v525
    %v527 = vpop.f32.mrb[0].mxu0
    %v528 = vpop.f32.mrb[0].mxu0
    %529 = vdwg.mxu0
    %v530 = vmax.f32 %v524, 0.0
    %v531 = vmax.f32 %v526, 0.0
    %v532 = vpack.c.bf16 %v530, %v530
    %v533 = vpack.c.bf16 %v531, %v531
    %v534 = vld [vmem:[#allocation8] sm:$0xf]
    %v535 = vld [vmem:[#allocation8 + $0x4] sm:$0xf]
    %v536 = vld [vmem:[#allocation8 + $0x8] sm:$0xf]
    %v537 = vld [vmem:[#allocation8 + $0xc] sm:$0xf]
    %v538 = vld [vmem:[#allocation8 + $0x10] sm:$0xf]
    %v539 = vld [vmem:[#allocation8 + $0x14] sm:$0xf]
    %v540 = vld [vmem:[#allocation8 + $0x18] sm:$0xf]
    %v541 = vld [vmem:[#allocation8 + $0x1c] sm:$0xf]
    %v542 = vld [vmem:[#allocation8 + $0x20] sm:$0xf]
    %v543 = vld [vmem:[#allocation8 + $0x24] sm:$0xf]
    %v544 = vld [vmem:[#allocation8 + $0x28] sm:$0xf]
    %v545 = vld [vmem:[#allocation8 + $0x2c] sm:$0xf]
    %v546 = vld [vmem:[#allocation8 + $0x30] sm:$0xf]
    %v547 = vld [vmem:[#allocation8 + $0x34] sm:$0xf]
    %v548 = vld [vmem:[#allocation8 + $0x38] sm:$0xf]
    %v549 = vld [vmem:[#allocation8 + $0x3c] sm:$0xf]
    %v550 = vld [vmem:[#allocation8 + $0x40] sm:$0xf]
    %v551 = vld [vmem:[#allocation8 + $0x44] sm:$0xf]
    %v552 = vld [vmem:[#allocation8 + $0x48] sm:$0xf]
    %v553 = vld [vmem:[#allocation8 + $0x4c] sm:$0xf]
    %v554 = vld [vmem:[#allocation8 + $0x50] sm:$0xf]
    %v555 = vld [vmem:[#allocation8 + $0x54] sm:$0xf]
    %v556 = vld [vmem:[#allocation8 + $0x58] sm:$0xf]
    %v557 = vld [vmem:[#allocation8 + $0x5c] sm:$0xf]
    %v558 = vld [vmem:[#allocation8 + $0x60] sm:$0xf]
    %v559 = vld [vmem:[#allocation8 + $0x64] sm:$0xf]
    %v560 = vld [vmem:[#allocation8 + $0x68] sm:$0xf]
    %v561 = vld [vmem:[#allocation8 + $0x6c] sm:$0xf]
    %v562 = vld [vmem:[#allocation8 + $0x70] sm:$0xf]
    %v563 = vld [vmem:[#allocation8 + $0x74] sm:$0xf]
    %v564 = vld [vmem:[#allocation8 + $0x78] sm:$0xf]
    %v565 = vld [vmem:[#allocation8 + $0x7c] sm:$0xf]
    %v598 = vunpack.c.l.b16 %v534
    %v599 = vunpack.c.l.b16 %v535
    %v600 = vunpack.c.l.b16 %v536
    %v601 = vunpack.c.l.b16 %v537
    %v602 = vunpack.c.l.b16 %v538
    %v603 = vunpack.c.l.b16 %v539
    %v604 = vunpack.c.l.b16 %v540
    %v605 = vunpack.c.l.b16 %v541
    %v606 = vunpack.c.l.b16 %v542
    %v607 = vunpack.c.l.b16 %v543
    %v608 = vunpack.c.l.b16 %v544
    %v609 = vunpack.c.l.b16 %v545
    %v610 = vunpack.c.l.b16 %v546
    %v611 = vunpack.c.l.b16 %v547
    %v612 = vunpack.c.l.b16 %v548
    %v613 = vunpack.c.l.b16 %v549
    %v614 = vunpack.c.l.b16 %v550
    %v615 = vunpack.c.l.b16 %v551
    %v616 = vunpack.c.l.b16 %v552
    %v617 = vunpack.c.l.b16 %v553
    %v618 = vunpack.c.l.b16 %v554
    %v619 = vunpack.c.l.b16 %v555
    %v620 = vunpack.c.l.b16 %v556
    %v621 = vunpack.c.l.b16 %v557
    %v622 = vunpack.c.l.b16 %v558
    %v623 = vunpack.c.l.b16 %v559
    %v624 = vunpack.c.l.b16 %v560
    %v625 = vunpack.c.l.b16 %v561
    %v626 = vunpack.c.l.b16 %v562
    %v627 = vunpack.c.l.b16 %v563
    %v628 = vunpack.c.l.b16 %v564
    %v629 = vunpack.c.l.b16 %v565
    %v630 = vpack.c.b16 %v599, %v598
    %v631 = vpack.c.b16 %v601, %v600
    %v632 = vpack.c.b16 %v603, %v602
    %v633 = vpack.c.b16 %v605, %v604
    %v634 = vpack.c.b16 %v607, %v606
    %v635 = vpack.c.b16 %v609, %v608
    %v636 = vpack.c.b16 %v611, %v610
    %v637 = vpack.c.b16 %v613, %v612
    %v638 = vpack.c.b16 %v615, %v614
    %v639 = vpack.c.b16 %v617, %v616
    %v640 = vpack.c.b16 %v619, %v618
    %v641 = vpack.c.b16 %v621, %v620
    %v642 = vpack.c.b16 %v623, %v622
    %v643 = vpack.c.b16 %v625, %v624
    %v644 = vpack.c.b16 %v627, %v626
    %v645 = vpack.c.b16 %v629, %v628
    %662 = vmatprep.subr.bf16.mxu0 0
    %663 = vmatpush1.bf16.msra.mxu0 %v630
    %664 = vmatprep.subr.bf16.mxu0 0
    %665 = vmatpush1.bf16.msra.mxu0 %v631
    %666 = vmatprep.subr.bf16.mxu0 0
    %667 = vmatpush1.bf16.msra.mxu0 %v632
    %668 = vmatprep.subr.bf16.mxu0 0
    %669 = vmatpush1.bf16.msra.mxu0 %v633
    %670 = vmatprep.subr.bf16.mxu0 0
    %671 = vmatpush1.bf16.msra.mxu0 %v634
    %672 = vmatprep.subr.bf16.mxu0 0
    %673 = vmatpush1.bf16.msra.mxu0 %v635
    %674 = vmatprep.subr.bf16.mxu0 0
    %675 = vmatpush1.bf16.msra.mxu0 %v636
    %676 = vmatprep.subr.bf16.mxu0 0
    %677 = vmatpush1.bf16.msra.mxu0 %v637
    %678 = vmatprep.subr.bf16.mxu0 0
    %679 = vmatpush1.bf16.msra.mxu0 %v638
    %680 = vmatprep.subr.bf16.mxu0 0
    %681 = vmatpush1.bf16.msra.mxu0 %v639
    %682 = vmatprep.subr.bf16.mxu0 0
    %683 = vmatpush1.bf16.msra.mxu0 %v640
    %684 = vmatprep.subr.bf16.mxu0 0
    %685 = vmatpush1.bf16.msra.mxu0 %v641
    %686 = vmatprep.subr.bf16.mxu0 0
    %687 = vmatpush1.bf16.msra.mxu0 %v642
    %688 = vmatprep.subr.bf16.mxu0 0
    %689 = vmatpush1.bf16.msra.mxu0 %v643
    %690 = vmatprep.subr.bf16.mxu0 0
    %691 = vmatpush1.bf16.msra.mxu0 %v644
    %692 = vmatprep.subr.bf16.mxu0 0
    %693 = vmatpush1.bf16.msra.mxu0 %v645
    %694 = vmatprep.mubr.bf16.mxu0 %v533
    %695 = vmatmul.mubr.bf16.gmra.mrb[0].mxu0 %v532
    %v696 = vpop.f32.mrb[0].mxu0
    %v697 = vadd.f32 %v288, %v696
    %v698 = vpop.f32.mrb[0].mxu0
    %v699 = vpop.f32.mrb[0].mxu0
    %v700 = vpop.f32.mrb[0].mxu0
    %701 = vdwg.mxu0
    %v702 = vpack.c.bf16 %v697, %v697
    %703 = vst [vmem:[#allocation10] sm:$0xf] %v702
    // Predicated region
    $region38: #{tpu_custom_call.1} parent=1 // pred_check
      _
    $region39: #{tpu_custom_call.1} parent=1 // pred_check_branch
      %705 = sbr.rel (0) target = $region41
    $region40: #{tpu_custom_call.1} parent=1 // pred_region
      %s707 = ssub.s32 64, 64
      %708 = vsyncadd [#allocation4], %s707
      %s710 = sshll.u32 [#allocation10], 4
      %s711 = int_to_ptr.vmem [resolvable:$true] %s710
      %713 = dma.vmem_to_hbm [thread:$0]  %s711, 64, %s5, [#allocation4]
    $region41: #{tpu_custom_call.1} parent=1 // pred_fallthru
      _
    // Predicated region
    $region42: #{tpu_custom_call.1} parent=1 // pred_check
      _
    $region43: #{tpu_custom_call.1} parent=1 // pred_check_branch
      %715 = sbr.rel (0) target = $region45
    $region44: #{tpu_custom_call.1} parent=1 // pred_region
      %716 = dma.done [#allocation4], 64
    $region45: #{tpu_custom_call.1} parent=1 // pred_fallthru
      _
    %717 = vsyncpa [#allocation3], 1
    %718 = vsyncpa [#allocation6], 1
    %719 = vsyncpa [#allocation9], 1
    %720 = vsyncpa [#allocation4], 1

// kernel: tpu_custom_call.1
$region0: #{tpu_custom_call.1}
  #allocation0 [shape = 'u32[]', space=smem, size = 0x4, offset = 0x4, fixed_abs, tag = 'smem constant byte address 0x4 - core index']
  #allocation1 [shape = 'u32[144,128]{1,0:T(1,128)}', space=vmem, size = 0x12000, scoped, tag = 'internal scratch']
  %s0 = inlined_call_operand.hbm [shape: bf16[8,32], index: 0, kind: input, shape index: {}]
  %s1 = inlined_call_operand.hbm [shape: bf16[32,640], index: 1, kind: input, shape index: {}]
  %s2 = inlined_call_operand.hbm [shape: bf16[256,256], index: 2, kind: input, shape index: {}]
  %s3 = inlined_call_operand.hbm [shape: bf16[256,128], index: 3, kind: input, shape index: {}]
  %s4 = inlined_call_operand.vmem [shape: f32[1,640], index: 4, kind: input, shape index: {}]
  %s5 = inlined_call_operand.hbm [shape: bf16[8,128], index: 5, kind: output, shape index: {}]
  %s6 = sld [smem:[#allocation0]]
  $region46: #{tpu_custom_call.1} parent=0
    _
  %s8 = ssub.s32 1, %s6
  %s9 = scalar_select 0, %s8, %s6
  $region1: #{tpu_custom_call.1} parent=0
    #allocation2 [shape = 'u8[2048]{0}', space=vmem, size = 0x800, scoped, tag = 'input window, operand 0, single buffered']
    #allocation3 [shape = 's32[1]{0}', space=sflag, size = 0x4, scoped, tag = 'scoped memory for tpu_custom_call.1']
    #allocation4 [shape = 's32[1]{0}', space=sflag, size = 0x4, scoped, tag = 'scoped memory for tpu_custom_call.1']
    #allocation5 [shape = 'u8[40960]{0}', space=vmem, size = 0xa000, scoped, tag = 'input window, operand 1, single buffered']
    #allocation6 [shape = 's32[1]{0}', space=sflag, size = 0x4, scoped, tag = 'scoped memory for tpu_custom_call.1']
    #allocation7 [shape = 'u8[131072]{0}', space=vmem, size = 0x20000, scoped, tag = 'input window, operand 2, single buffered']
    #allocation8 [shape = 'u8[65536]{0}', space=vmem, size = 0x10000, scoped, tag = 'input window, operand 3, single buffered']
    #allocation9 [shape = 's32[1]{0}', space=sflag, size = 0x4, scoped, tag = 'scoped memory for tpu_custom_call.1']
    #allocation10 [shape = 'u8[2048]{0}', space=vmem, size = 0x800, scoped, tag = 'output window, operand 0, single buffered']
    %10 = vsyncpa [#allocation3], 0
    %11 = vsyncpa [#allocation6], 0
    %12 = vsyncpa [#allocation9], 0
    %13 = vsyncpa [#allocation4], 0
    // Predicated region
    $region2: #{tpu_custom_call.1} parent=1 // pred_check
      _
    $region3: #{tpu_custom_call.1} parent=1 // pred_check_branch
      %15 = sbr.rel (0) target = $region5
    $region4: #{tpu_custom_call.1} parent=1 // pred_region
      %s17 = ssub.s32 64, 64
      %18 = vsyncadd [#allocation3], %s17
      %s20 = sshll.u32 [#allocation2], 4
      %s21 = int_to_ptr.vmem [resolvable:$true] %s20
      %23 = dma.hbm_to_vmem [thread:$0]  %s0, 64, %s21, [#allocation3]
    $region5: #{tpu_custom_call.1} parent=1 // pred_fallthru
      _
    // Predicated region
    $region6: #{tpu_custom_call.1} parent=1 // pred_check
      _
    $region7: #{tpu_custom_call.1} parent=1 // pred_check_branch
      %25 = sbr.rel (0) target = $region9
    $region8: #{tpu_custom_call.1} parent=1 // pred_region
      %s27 = ssub.s32 1280, 1280
      %28 = vsyncadd [#allocation6], %s27
      %s29 = sshll.u32 [#allocation5], 4
      %s30 = int_to_ptr.vmem [resolvable:$true] %s29
      %35 = dma.hbm_to_vmem [thread:$0]  %s1, 1280, %s30, [#allocation6], 320, 320, 20
    $region9: #{tpu_custom_call.1} parent=1 // pred_fallthru
      _
    // Predicated region
    $region10: #{tpu_custom_call.1} parent=1 // pred_check
      _
    $region11: #{tpu_custom_call.1} parent=1 // pred_check_branch
      %37 = sbr.rel (0) target = $region13
    $region12: #{tpu_custom_call.1} parent=1 // pred_region
      %s39 = ssub.s32 4096, 4096
      %40 = vsyncadd [#allocation6], %s39
      %s41 = sshll.u32 [#allocation7], 4
      %s42 = int_to_ptr.vmem [resolvable:$true] %s41
      %47 = dma.hbm_to_vmem [thread:$0]  %s2, 4096, %s42, [#allocation6], 128, 128, 8
    $region13: #{tpu_custom_call.1} parent=1 // pred_fallthru
      _
    // Predicated region
    $region14: #{tpu_custom_call.1} parent=1 // pred_check
      _
    $region15: #{tpu_custom_call.1} parent=1 // pred_check_branch
      %49 = sbr.rel (0) target = $region17
    $region16: #{tpu_custom_call.1} parent=1 // pred_region
      %s51 = ssub.s32 2048, 2048
      %52 = vsyncadd [#allocation9], %s51
      %s53 = sshll.u32 [#allocation8], 4
      %s54 = int_to_ptr.vmem [resolvable:$true] %s53
      %59 = dma.hbm_to_vmem [thread:$0]  %s3, 2048, %s54, [#allocation9], 64, 64, 4
    $region17: #{tpu_custom_call.1} parent=1 // pred_fallthru
      _
    // Predicated region
    $region18: #{tpu_custom_call.1} parent=1 // pred_check
      _
    $region19: #{tpu_custom_call.1} parent=1 // pred_check_branch
      %61 = sbr.rel (0) target = $region21
    $region20: #{tpu_custom_call.1} parent=1 // pred_region
      _
    $region21: #{tpu_custom_call.1} parent=1 // pred_fallthru
      _
    // Predicated region
    $region22: #{tpu_custom_call.1} parent=1 // pred_check
      _
    $region23: #{tpu_custom_call.1} parent=1 // pred_check_branch
      %63 = sbr.rel (0) target = $region25
    $region24: #{tpu_custom_call.1} parent=1 // pred_region
      %64 = dma.done [#allocation3], 64
    $region25: #{tpu_custom_call.1} parent=1 // pred_fallthru
      _
    // Predicated region
    $region26: #{tpu_custom_call.1} parent=1 // pred_check
      _
    $region27: #{tpu_custom_call.1} parent=1 // pred_check_branch
      %66 = sbr.rel (0) target = $region29
    $region28: #{tpu_custom_call.1} parent=1 // pred_region
      %67 = dma.done [#allocation6], 1280
    $region29: #{tpu_custom_call.1} parent=1 // pred_fallthru
      _
    // Predicated region
    $region30: #{tpu_custom_call.1} parent=1 // pred_check
      _
    $region31: #{tpu_custom_call.1} parent=1 // pred_check_branch
      %69 = sbr.rel (0) target = $region33
    $region32: #{tpu_custom_call.1} parent=1 // pred_region
      %70 = dma.done [#allocation6], 4096
    $region33: #{tpu_custom_call.1} parent=1 // pred_fallthru
      _
    // Predicated region
    $region34: #{tpu_custom_call.1} parent=1 // pred_check
      _
    $region35: #{tpu_custom_call.1} parent=1 // pred_check_branch
      %72 = sbr.rel (0) target = $region37
    $region36: #{tpu_custom_call.1} parent=1 // pred_region
      %73 = dma.done [#allocation9], 2048
    $region37: #{tpu_custom_call.1} parent=1 // pred_fallthru
      _
    %v75 = vld [vmem:[#allocation2] sm:$0xf]
    %v76 = vld [vmem:[#allocation5] sm:$0xff]
    %v77 = vld [vmem:[#allocation5 + $0x8] sm:$0xff]
    %v78 = vld [vmem:[#allocation5 + $0x10] sm:$0xf]
    %v79 = vld [vmem:[#allocation5 + $0x14] sm:$0xff]
    %v80 = vld [vmem:[#allocation5 + $0x1c] sm:$0xff]
    %v81 = vld [vmem:[#allocation5 + $0x24] sm:$0xf]
    %v82 = vld [vmem:[#allocation5 + $0x28] sm:$0xff]
    %v83 = vld [vmem:[#allocation5 + $0x30] sm:$0xff]
    %v84 = vld [vmem:[#allocation5 + $0x38] sm:$0xf]
    %v85 = vld [vmem:[#allocation5 + $0x3c] sm:$0xff]
    %v86 = vld [vmem:[#allocation5 + $0x44] sm:$0xff]
    %v87 = vld [vmem:[#allocation5 + $0x4c] sm:$0xf]
    %v88 = vld [vmem:[%s4] sm:$0x1f]
    %v90 = vlaneseq
    %v91 = vshrl.u32 %v90, 7
    %v92 = vsub.s32 0, %v91
    %v93 = vrot.slane %v88, %v92
    %v94 = vlaneseq
    %v95 = vshrl.u32 %v94, 7
    %v96 = vsub.s32 1, %v95
    %v97 = vrot.slane %v88, %v96
    %v98 = vlaneseq
    %v99 = vshrl.u32 %v98, 7
    %v100 = vsub.s32 2, %v99
    %v101 = vrot.slane %v88, %v100
    %v102 = vlaneseq
    %v103 = vshrl.u32 %v102, 7
    %v104 = vsub.s32 3, %v103
    %v105 = vrot.slane %v88, %v104
    %v106 = vlaneseq
    %v107 = vshrl.u32 %v106, 7
    %v108 = vsub.s32 4, %v107
    %v109 = vrot.slane %v88, %v108
    %v127 = vunpack.c.l.b16 %v76
    %v128 = vunpack.c.h.b16 %v76
    %v129 = vunpack.c.l.b16 %v77
    %v130 = vunpack.c.h.b16 %v77
    %v131 = vunpack.c.l.b16 %v78
    %v132 = vunpack.c.l.b16 %v79
    %v133 = vunpack.c.h.b16 %v79
    %v134 = vunpack.c.l.b16 %v80
    %v135 = vunpack.c.h.b16 %v80
    %v136 = vunpack.c.l.b16 %v81
    %v137 = vunpack.c.l.b16 %v82
    %v138 = vunpack.c.h.b16 %v82
    %v139 = vunpack.c.l.b16 %v83
    %v140 = vunpack.c.h.b16 %v83
    %v141 = vunpack.c.l.b16 %v84
    %v142 = vunpack.c.l.b16 %v85
    %v143 = vunpack.c.h.b16 %v85
    %v144 = vunpack.c.l.b16 %v86
    %v145 = vunpack.c.h.b16 %v86
    %v146 = vunpack.c.l.b16 %v87
    %v147 = vpack.c.b16 %v132, %v127
    %v148 = vpack.c.b16 %v133, %v128
    %v149 = vpack.c.b16 %v134, %v129
    %v150 = vpack.c.b16 %v135, %v130
    %v151 = vpack.c.b16 %v136, %v131
    %v152 = vpack.c.b16 %v142, %v137
    %v153 = vpack.c.b16 %v143, %v138
    %v154 = vpack.c.b16 %v144, %v139
    %v155 = vpack.c.b16 %v145, %v140
    %v156 = vpack.c.b16 %v146, %v141
    %vm167 = vcmask 261120
    %v169 = vsel %vm167, %v75, 0
    %171 = vmatprep.subr.bf16.mxu0 %v148
    %172 = vmatpush1.bf16.msra.mxu0 %v147
    %173 = vmatprep.subr.bf16.mxu0 %v153
    %174 = vmatpush1.bf16.msra.mxu0 %v152
    %175 = vmatprep.subr.bf16.mxu0 0
    %176 = vmatpush1.bf16.msra.mxu0 0
    %177 = vmatprep.subr.bf16.mxu0 0
    %178 = vmatpush1.bf16.msra.mxu0 0
    %179 = vmatprep.subr.bf16.mxu0 0
    %180 = vmatpush1.bf16.msra.mxu0 0
    %181 = vmatprep.subr.bf16.mxu0 0
    %182 = vmatpush1.bf16.msra.mxu0 0
    %183 = vmatprep.subr.bf16.mxu0 0
    %184 = vmatpush1.bf16.msra.mxu0 0
    %185 = vmatprep.subr.bf16.mxu0 0
    %186 = vmatpush1.bf16.msra.mxu0 0
    %187 = vmatprep.subr.bf16.mxu0 0
    %188 = vmatpush1.bf16.msra.mxu0 0
    %189 = vmatprep.subr.bf16.mxu0 0
    %190 = vmatpush1.bf16.msra.mxu0 0
    %191 = vmatprep.subr.bf16.mxu0 0
    %192 = vmatpush1.bf16.msra.mxu0 0
    %193 = vmatprep.subr.bf16.mxu0 0
    %194 = vmatpush1.bf16.msra.mxu0 0
    %195 = vmatprep.subr.bf16.mxu0 0
    %196 = vmatpush1.bf16.msra.mxu0 0
    %197 = vmatprep.subr.bf16.mxu0 0
    %198 = vmatpush1.bf16.msra.mxu0 0
    %199 = vmatprep.subr.bf16.mxu0 0
    %200 = vmatpush1.bf16.msra.mxu0 0
    %201 = vmatprep.subr.bf16.mxu0 0
    %202 = vmatpush1.bf16.msra.mxu0 0
    %203 = vmatprep.mubr.bf16.mxu0 0
    %204 = vmatmul.mubr.bf16.gmra.mrb[0].mxu0 %v169
    %v205 = vpop.f32.mrb[0].mxu0
    %v206 = vadd.f32 %v93, %v205
    %v207 = vpop.f32.mrb[0].mxu0
    %v208 = vadd.f32 %v97, %v207
    %v209 = vpop.f32.mrb[0].mxu0
    %v210 = vpop.f32.mrb[0].mxu0
    %211 = vdwg.mxu0
    %212 = vmatprep.subr.bf16.mxu0 %v150
    %213 = vmatpush1.bf16.msra.mxu0 %v149
    %214 = vmatprep.subr.bf16.mxu0 %v155
    %215 = vmatpush1.bf16.msra.mxu0 %v154
    %216 = vmatprep.subr.bf16.mxu0 0
    %217 = vmatpush1.bf16.msra.mxu0 0
    %218 = vmatprep.subr.bf16.mxu0 0
    %219 = vmatpush1.bf16.msra.mxu0 0
    %220 = vmatprep.subr.bf16.mxu0 0
    %221 = vmatpush1.bf16.msra.mxu0 0
    %222 = vmatprep.subr.bf16.mxu0 0
    %223 = vmatpush1.bf16.msra.mxu0 0
    %224 = vmatprep.subr.bf16.mxu0 0
    %225 = vmatpush1.bf16.msra.mxu0 0
    %226 = vmatprep.subr.bf16.mxu0 0
    %227 = vmatpush1.bf16.msra.mxu0 0
    %228 = vmatprep.subr.bf16.mxu0 0
    %229 = vmatpush1.bf16.msra.mxu0 0
    %230 = vmatprep.subr.bf16.mxu0 0
    %231 = vmatpush1.bf16.msra.mxu0 0
    %232 = vmatprep.subr.bf16.mxu0 0
    %233 = vmatpush1.bf16.msra.mxu0 0
    %234 = vmatprep.subr.bf16.mxu0 0
    %235 = vmatpush1.bf16.msra.mxu0 0
    %236 = vmatprep.subr.bf16.mxu0 0
    %237 = vmatpush1.bf16.msra.mxu0 0
    %238 = vmatprep.subr.bf16.mxu0 0
    %239 = vmatpush1.bf16.msra.mxu0 0
    %240 = vmatprep.subr.bf16.mxu0 0
    %241 = vmatpush1.bf16.msra.mxu0 0
    %242 = vmatprep.subr.bf16.mxu0 0
    %243 = vmatpush1.bf16.msra.mxu0 0
    %244 = vmatprep.mubr.bf16.mxu0 0
    %245 = vmatmul.mubr.bf16.gmra.mrb[0].mxu0 %v169
    %v246 = vpop.f32.mrb[0].mxu0
    %v247 = vadd.f32 %v101, %v246
    %v248 = vpop.f32.mrb[0].mxu0
    %v249 = vadd.f32 %v105, %v248
    %v250 = vpop.f32.mrb[0].mxu0
    %v251 = vpop.f32.mrb[0].mxu0
    %252 = vdwg.mxu0
    %253 = vmatprep.subr.bf16.mxu0 0
    %254 = vmatpush1.bf16.msra.mxu0 %v151
    %255 = vmatprep.subr.bf16.mxu0 0
    %256 = vmatpush1.bf16.msra.mxu0 %v156
    %257 = vmatprep.subr.bf16.mxu0 0
    %258 = vmatpush1.bf16.msra.mxu0 0
    %259 = vmatprep.subr.bf16.mxu0 0
    %260 = vmatpush1.bf16.msra.mxu0 0
    %261 = vmatprep.subr.bf16.mxu0 0
    %262 = vmatpush1.bf16.msra.mxu0 0
    %263 = vmatprep.subr.bf16.mxu0 0
    %264 = vmatpush1.bf16.msra.mxu0 0
    %265 = vmatprep.subr.bf16.mxu0 0
    %266 = vmatpush1.bf16.msra.mxu0 0
    %267 = vmatprep.subr.bf16.mxu0 0
    %268 = vmatpush1.bf16.msra.mxu0 0
    %269 = vmatprep.subr.bf16.mxu0 0
    %270 = vmatpush1.bf16.msra.mxu0 0
    %271 = vmatprep.subr.bf16.mxu0 0
    %272 = vmatpush1.bf16.msra.mxu0 0
    %273 = vmatprep.subr.bf16.mxu0 0
    %274 = vmatpush1.bf16.msra.mxu0 0
    %275 = vmatprep.subr.bf16.mxu0 0
    %276 = vmatpush1.bf16.msra.mxu0 0
    %277 = vmatprep.subr.bf16.mxu0 0
    %278 = vmatpush1.bf16.msra.mxu0 0
    %279 = vmatprep.subr.bf16.mxu0 0
    %280 = vmatpush1.bf16.msra.mxu0 0
    %281 = vmatprep.subr.bf16.mxu0 0
    %282 = vmatpush1.bf16.msra.mxu0 0
    %283 = vmatprep.subr.bf16.mxu0 0
    %284 = vmatpush1.bf16.msra.mxu0 0
    %285 = vmatprep.mubr.bf16.mxu0 0
    %286 = vmatmul.mubr.bf16.gmra.mrb[0].mxu0 %v169
    %v287 = vpop.f32.mrb[0].mxu0
    %v288 = vadd.f32 %v109, %v287
    %v289 = vpop.f32.mrb[0].mxu0
    %v290 = vpop.f32.mrb[0].mxu0
    %v291 = vpop.f32.mrb[0].mxu0
    %292 = vdwg.mxu0
    %v293 = vmax.f32 %v206, 0.0
    %v294 = vmax.f32 %v208, 0.0
    %v295 = vpack.c.bf16 %v293, %v293
    %v296 = vpack.c.bf16 %v294, %v294
    %v297 = vld [vmem:[#allocation7] sm:$0xff]
    %v298 = vld [vmem:[#allocation7 + $0x8] sm:$0xff]
    %v299 = vld [vmem:[#allocation7 + $0x10] sm:$0xff]
    %v300 = vld [vmem:[#allocation7 + $0x18] sm:$0xff]
    %v301 = vld [vmem:[#allocation7 + $0x20] sm:$0xff]
    %v302 = vld [vmem:[#allocation7 + $0x28] sm:$0xff]
    %v303 = vld [vmem:[#allocation7 + $0x30] sm:$0xff]
    %v304 = vld [vmem:[#allocation7 + $0x38] sm:$0xff]
    %v305 = vld [vmem:[#allocation7 + $0x40] sm:$0xff]
    %v306 = vld [vmem:[#allocation7 + $0x48] sm:$0xff]
    %v307 = vld [vmem:[#allocation7 + $0x50] sm:$0xff]
    %v308 = vld [vmem:[#allocation7 + $0x58] sm:$0xff]
    %v309 = vld [vmem:[#allocation7 + $0x60] sm:$0xff]
    %v310 = vld [vmem:[#allocation7 + $0x68] sm:$0xff]
    %v311 = vld [vmem:[#allocation7 + $0x70] sm:$0xff]
    %v312 = vld [vmem:[#allocation7 + $0x78] sm:$0xff]
    %v313 = vld [vmem:[#allocation7 + $0x80] sm:$0xff]
    %v314 = vld [vmem:[#allocation7 + $0x88] sm:$0xff]
    %v315 = vld [vmem:[#allocation7 + $0x90] sm:$0xff]
    %v316 = vld [vmem:[#allocation7 + $0x98] sm:$0xff]
    %v317 = vld [vmem:[#allocation7 + $0xa0] sm:$0xff]
    %v318 = vld [vmem:[#allocation7 + $0xa8] sm:$0xff]
    %v319 = vld [vmem:[#allocation7 + $0xb0] sm:$0xff]
    %v320 = vld [vmem:[#allocation7 + $0xb8] sm:$0xff]
    %v321 = vld [vmem:[#allocation7 + $0xc0] sm:$0xff]
    %v322 = vld [vmem:[#allocation7 + $0xc8] sm:$0xff]
    %v323 = vld [vmem:[#allocation7 + $0xd0] sm:$0xff]
    %v324 = vld [vmem:[#allocation7 + $0xd8] sm:$0xff]
    %v325 = vld [vmem:[#allocation7 + $0xe0] sm:$0xff]
    %v326 = vld [vmem:[#allocation7 + $0xe8] sm:$0xff]
    %v327 = vld [vmem:[#allocation7 + $0xf0] sm:$0xff]
    %v328 = vld [vmem:[#allocation7 + $0xf8] sm:$0xff]
    %v361 = vunpack.c.l.b16 %v297
    %v362 = vunpack.c.h.b16 %v297
    %v363 = vunpack.c.l.b16 %v298
    %v364 = vunpack.c.h.b16 %v298
    %v365 = vunpack.c.l.b16 %v299
    %v366 = vunpack.c.h.b16 %v299
    %v367 = vunpack.c.l.b16 %v300
    %v368 = vunpack.c.h.b16 %v300
    %v369 = vunpack.c.l.b16 %v301
    %v370 = vunpack.c.h.b16 %v301
    %v371 = vunpack.c.l.b16 %v302
    %v372 = vunpack.c.h.b16 %v302
    %v373 = vunpack.c.l.b16 %v303
    %v374 = vunpack.c.h.b16 %v303
    %v375 = vunpack.c.l.b16 %v304
    %v376 = vunpack.c.h.b16 %v304
    %v377 = vunpack.c.l.b16 %v305
    %v378 = vunpack.c.h.b16 %v305
    %v379 = vunpack.c.l.b16 %v306
    %v380 = vunpack.c.h.b16 %v306
    %v381 = vunpack.c.l.b16 %v307
    %v382 = vunpack.c.h.b16 %v307
    %v383 = vunpack.c.l.b16 %v308
    %v384 = vunpack.c.h.b16 %v308
    %v385 = vunpack.c.l.b16 %v309
    %v386 = vunpack.c.h.b16 %v309
    %v387 = vunpack.c.l.b16 %v310
    %v388 = vunpack.c.h.b16 %v310
    %v389 = vunpack.c.l.b16 %v311
    %v390 = vunpack.c.h.b16 %v311
    %v391 = vunpack.c.l.b16 %v312
    %v392 = vunpack.c.h.b16 %v312
    %v393 = vunpack.c.l.b16 %v313
    %v394 = vunpack.c.h.b16 %v313
    %v395 = vunpack.c.l.b16 %v314
    %v396 = vunpack.c.h.b16 %v314
    %v397 = vunpack.c.l.b16 %v315
    %v398 = vunpack.c.h.b16 %v315
    %v399 = vunpack.c.l.b16 %v316
    %v400 = vunpack.c.h.b16 %v316
    %v401 = vunpack.c.l.b16 %v317
    %v402 = vunpack.c.h.b16 %v317
    %v403 = vunpack.c.l.b16 %v318
    %v404 = vunpack.c.h.b16 %v318
    %v405 = vunpack.c.l.b16 %v319
    %v406 = vunpack.c.h.b16 %v319
    %v407 = vunpack.c.l.b16 %v320
    %v408 = vunpack.c.h.b16 %v320
    %v409 = vunpack.c.l.b16 %v321
    %v410 = vunpack.c.h.b16 %v321
    %v411 = vunpack.c.l.b16 %v322
    %v412 = vunpack.c.h.b16 %v322
    %v413 = vunpack.c.l.b16 %v323
    %v414 = vunpack.c.h.b16 %v323
    %v415 = vunpack.c.l.b16 %v324
    %v416 = vunpack.c.h.b16 %v324
    %v417 = vunpack.c.l.b16 %v325
    %v418 = vunpack.c.h.b16 %v325
    %v419 = vunpack.c.l.b16 %v326
    %v420 = vunpack.c.h.b16 %v326
    %v421 = vunpack.c.l.b16 %v327
    %v422 = vunpack.c.h.b16 %v327
    %v423 = vunpack.c.l.b16 %v328
    %v424 = vunpack.c.h.b16 %v328
    %v425 = vpack.c.b16 %v363, %v361
    %v426 = vpack.c.b16 %v364, %v362
    %v427 = vpack.c.b16 %v367, %v365
    %v428 = vpack.c.b16 %v368, %v366
    %v429 = vpack.c.b16 %v371, %v369
    %v430 = vpack.c.b16 %v372, %v370
    %v431 = vpack.c.b16 %v375, %v373
    %v432 = vpack.c.b16 %v376, %v374
    %v433 = vpack.c.b16 %v379, %v377
    %v434 = vpack.c.b16 %v380, %v378
    %v435 = vpack.c.b16 %v383, %v381
    %v436 = vpack.c.b16 %v384, %v382
    %v437 = vpack.c.b16 %v387, %v385
    %v438 = vpack.c.b16 %v388, %v386
    %v439 = vpack.c.b16 %v391, %v389
    %v440 = vpack.c.b16 %v392, %v390
    %v441 = vpack.c.b16 %v395, %v393
    %v442 = vpack.c.b16 %v396, %v394
    %v443 = vpack.c.b16 %v399, %v397
    %v444 = vpack.c.b16 %v400, %v398
    %v445 = vpack.c.b16 %v403, %v401
    %v446 = vpack.c.b16 %v404, %v402
    %v447 = vpack.c.b16 %v407, %v405
    %v448 = vpack.c.b16 %v408, %v406
    %v449 = vpack.c.b16 %v411, %v409
    %v450 = vpack.c.b16 %v412, %v410
    %v451 = vpack.c.b16 %v415, %v413
    %v452 = vpack.c.b16 %v416, %v414
    %v453 = vpack.c.b16 %v419, %v417
    %v454 = vpack.c.b16 %v420, %v418
    %v455 = vpack.c.b16 %v423, %v421
    %v456 = vpack.c.b16 %v424, %v422
    %489 = vmatprep.subr.bf16.mxu0 %v426
    %490 = vmatpush1.bf16.msra.mxu0 %v425
    %491 = vmatprep.subr.bf16.mxu0 %v428
    %492 = vmatpush1.bf16.msra.mxu0 %v427
    %493 = vmatprep.subr.bf16.mxu0 %v430
    %494 = vmatpush1.bf16.msra.mxu0 %v429
    %495 = vmatprep.subr.bf16.mxu0 %v432
    %496 = vmatpush1.bf16.msra.mxu0 %v431
    %497 = vmatprep.subr.bf16.mxu0 %v434
    %498 = vmatpush1.bf16.msra.mxu0 %v433
    %499 = vmatprep.subr.bf16.mxu0 %v436
    %500 = vmatpush1.bf16.msra.mxu0 %v435
    %501 = vmatprep.subr.bf16.mxu0 %v438
    %502 = vmatpush1.bf16.msra.mxu0 %v437
    %503 = vmatprep.subr.bf16.mxu0 %v440
    %504 = vmatpush1.bf16.msra.mxu0 %v439
    %505 = vmatprep.subr.bf16.mxu0 %v442
    %506 = vmatpush1.bf16.msra.mxu0 %v441
    %507 = vmatprep.subr.bf16.mxu0 %v444
    %508 = vmatpush1.bf16.msra.mxu0 %v443
    %509 = vmatprep.subr.bf16.mxu0 %v446
    %510 = vmatpush1.bf16.msra.mxu0 %v445
    %511 = vmatprep.subr.bf16.mxu0 %v448
    %512 = vmatpush1.bf16.msra.mxu0 %v447
    %513 = vmatprep.subr.bf16.mxu0 %v450
    %514 = vmatpush1.bf16.msra.mxu0 %v449
    %515 = vmatprep.subr.bf16.mxu0 %v452
    %516 = vmatpush1.bf16.msra.mxu0 %v451
    %517 = vmatprep.subr.bf16.mxu0 %v454
    %518 = vmatpush1.bf16.msra.mxu0 %v453
    %519 = vmatprep.subr.bf16.mxu0 %v456
    %520 = vmatpush1.bf16.msra.mxu0 %v455
    %521 = vmatprep.mubr.bf16.mxu0 %v296
    %522 = vmatmul.mubr.bf16.gmra.mrb[0].mxu0 %v295
    %v523 = vpop.f32.mrb[0].mxu0
    %v524 = vadd.f32 %v247, %v523
    %v525 = vpop.f32.mrb[0].mxu0
    %v526 = vadd.f32 %v249, %v525
    %v527 = vpop.f32.mrb[0].mxu0
    %v528 = vpop.f32.mrb[0].mxu0
    %529 = vdwg.mxu0
    %v530 = vmax.f32 %v524, 0.0
    %v531 = vmax.f32 %v526, 0.0
    %v532 = vpack.c.bf16 %v530, %v530
    %v533 = vpack.c.bf16 %v531, %v531
    %v534 = vld [vmem:[#allocation8] sm:$0xf]
    %v535 = vld [vmem:[#allocation8 + $0x4] sm:$0xf]
    %v536 = vld [vmem:[#allocation8 + $0x8] sm:$0xf]
    %v537 = vld [vmem:[#allocation8 + $0xc] sm:$0xf]
    %v538 = vld [vmem:[#allocation8 + $0x10] sm:$0xf]
    %v539 = vld [vmem:[#allocation8 + $0x14] sm:$0xf]
    %v540 = vld [vmem:[#allocation8 + $0x18] sm:$0xf]
    %v541 = vld [vmem:[#allocation8 + $0x1c] sm:$0xf]
    %v542 = vld [vmem:[#allocation8 + $0x20] sm:$0xf]
    %v543 = vld [vmem:[#allocation8 + $0x24] sm:$0xf]
    %v544 = vld [vmem:[#allocation8 + $0x28] sm:$0xf]
    %v545 = vld [vmem:[#allocation8 + $0x2c] sm:$0xf]
    %v546 = vld [vmem:[#allocation8 + $0x30] sm:$0xf]
    %v547 = vld [vmem:[#allocation8 + $0x34] sm:$0xf]
    %v548 = vld [vmem:[#allocation8 + $0x38] sm:$0xf]
    %v549 = vld [vmem:[#allocation8 + $0x3c] sm:$0xf]
    %v550 = vld [vmem:[#allocation8 + $0x40] sm:$0xf]
    %v551 = vld [vmem:[#allocation8 + $0x44] sm:$0xf]
    %v552 = vld [vmem:[#allocation8 + $0x48] sm:$0xf]
    %v553 = vld [vmem:[#allocation8 + $0x4c] sm:$0xf]
    %v554 = vld [vmem:[#allocation8 + $0x50] sm:$0xf]
    %v555 = vld [vmem:[#allocation8 + $0x54] sm:$0xf]
    %v556 = vld [vmem:[#allocation8 + $0x58] sm:$0xf]
    %v557 = vld [vmem:[#allocation8 + $0x5c] sm:$0xf]
    %v558 = vld [vmem:[#allocation8 + $0x60] sm:$0xf]
    %v559 = vld [vmem:[#allocation8 + $0x64] sm:$0xf]
    %v560 = vld [vmem:[#allocation8 + $0x68] sm:$0xf]
    %v561 = vld [vmem:[#allocation8 + $0x6c] sm:$0xf]
    %v562 = vld [vmem:[#allocation8 + $0x70] sm:$0xf]
    %v563 = vld [vmem:[#allocation8 + $0x74] sm:$0xf]
    %v564 = vld [vmem:[#allocation8 + $0x78] sm:$0xf]
    %v565 = vld [vmem:[#allocation8 + $0x7c] sm:$0xf]
    %v598 = vunpack.c.l.b16 %v534
    %v599 = vunpack.c.l.b16 %v535
    %v600 = vunpack.c.l.b16 %v536
    %v601 = vunpack.c.l.b16 %v537
    %v602 = vunpack.c.l.b16 %v538
    %v603 = vunpack.c.l.b16 %v539
    %v604 = vunpack.c.l.b16 %v540
    %v605 = vunpack.c.l.b16 %v541
    %v606 = vunpack.c.l.b16 %v542
    %v607 = vunpack.c.l.b16 %v543
    %v608 = vunpack.c.l.b16 %v544
    %v609 = vunpack.c.l.b16 %v545
    %v610 = vunpack.c.l.b16 %v546
    %v611 = vunpack.c.l.b16 %v547
    %v612 = vunpack.c.l.b16 %v548
    %v613 = vunpack.c.l.b16 %v549
    %v614 = vunpack.c.l.b16 %v550
    %v615 = vunpack.c.l.b16 %v551
    %v616 = vunpack.c.l.b16 %v552
    %v617 = vunpack.c.l.b16 %v553
    %v618 = vunpack.c.l.b16 %v554
    %v619 = vunpack.c.l.b16 %v555
    %v620 = vunpack.c.l.b16 %v556
    %v621 = vunpack.c.l.b16 %v557
    %v622 = vunpack.c.l.b16 %v558
    %v623 = vunpack.c.l.b16 %v559
    %v624 = vunpack.c.l.b16 %v560
    %v625 = vunpack.c.l.b16 %v561
    %v626 = vunpack.c.l.b16 %v562
    %v627 = vunpack.c.l.b16 %v563
    %v628 = vunpack.c.l.b16 %v564
    %v629 = vunpack.c.l.b16 %v565
    %v630 = vpack.c.b16 %v599, %v598
    %v631 = vpack.c.b16 %v601, %v600
    %v632 = vpack.c.b16 %v603, %v602
    %v633 = vpack.c.b16 %v605, %v604
    %v634 = vpack.c.b16 %v607, %v606
    %v635 = vpack.c.b16 %v609, %v608
    %v636 = vpack.c.b16 %v611, %v610
    %v637 = vpack.c.b16 %v613, %v612
    %v638 = vpack.c.b16 %v615, %v614
    %v639 = vpack.c.b16 %v617, %v616
    %v640 = vpack.c.b16 %v619, %v618
    %v641 = vpack.c.b16 %v621, %v620
    %v642 = vpack.c.b16 %v623, %v622
    %v643 = vpack.c.b16 %v625, %v624
    %v644 = vpack.c.b16 %v627, %v626
    %v645 = vpack.c.b16 %v629, %v628
    %662 = vmatprep.subr.bf16.mxu0 0
    %663 = vmatpush1.bf16.msra.mxu0 %v630
    %664 = vmatprep.subr.bf16.mxu0 0
    %665 = vmatpush1.bf16.msra.mxu0 %v631
    %666 = vmatprep.subr.bf16.mxu0 0
    %667 = vmatpush1.bf16.msra.mxu0 %v632
    %668 = vmatprep.subr.bf16.mxu0 0
    %669 = vmatpush1.bf16.msra.mxu0 %v633
    %670 = vmatprep.subr.bf16.mxu0 0
    %671 = vmatpush1.bf16.msra.mxu0 %v634
    %672 = vmatprep.subr.bf16.mxu0 0
    %673 = vmatpush1.bf16.msra.mxu0 %v635
    %674 = vmatprep.subr.bf16.mxu0 0
    %675 = vmatpush1.bf16.msra.mxu0 %v636
    %676 = vmatprep.subr.bf16.mxu0 0
    %677 = vmatpush1.bf16.msra.mxu0 %v637
    %678 = vmatprep.subr.bf16.mxu0 0
    %679 = vmatpush1.bf16.msra.mxu0 %v638
    %680 = vmatprep.subr.bf16.mxu0 0
    %681 = vmatpush1.bf16.msra.mxu0 %v639
    %682 = vmatprep.subr.bf16.mxu0 0
    %683 = vmatpush1.bf16.msra.mxu0 %v640
    %684 = vmatprep.subr.bf16.mxu0 0
    %685 = vmatpush1.bf16.msra.mxu0 %v641
    %686 = vmatprep.subr.bf16.mxu0 0
    %687 = vmatpush1.bf16.msra.mxu0 %v642
    %688 = vmatprep.subr.bf16.mxu0 0
    %689 = vmatpush1.bf16.msra.mxu0 %v643
    %690 = vmatprep.subr.bf16.mxu0 0
    %691 = vmatpush1.bf16.msra.mxu0 %v644
    %692 = vmatprep.subr.bf16.mxu0 0
    %693 = vmatpush1.bf16.msra.mxu0 %v645
    %694 = vmatprep.mubr.bf16.mxu0 %v533
    %695 = vmatmul.mubr.bf16.gmra.mrb[0].mxu0 %v532
    %v696 = vpop.f32.mrb[0].mxu0
    %v697 = vadd.f32 %v288, %v696
    %v698 = vpop.f32.mrb[0].mxu0
    %v699 = vpop.f32.mrb[0].mxu0
    %v700 = vpop.f32.mrb[0].mxu0
    %701 = vdwg.mxu0
    %v702 = vpack.c.bf16 %v697, %v697
    %703 = vst [vmem:[#allocation10] sm:$0xf] %v702
    // Predicated region
    $region38: #{tpu_custom_call.1} parent=1 // pred_check
      _
    $region39: #{tpu_custom_call.1} parent=1 // pred_check_branch
      %705 = sbr.rel (0) target = $region41
    $region40: #{tpu_custom_call.1} parent=1 // pred_region
      %s707 = ssub.s32 64, 64
      %708 = vsyncadd [#allocation4], %s707
      %s710 = sshll.u32 [#allocation10], 4
      %s711 = int_to_ptr.vmem [resolvable:$true] %s710
      %713 = dma.vmem_to_hbm [thread:$0]  %s711, 64, %s5, [#allocation4]
    $region41: #{tpu_custom_call.1} parent=1 // pred_fallthru
      _
    // Predicated region
    $region42: #{tpu_custom_call.1} parent=1 // pred_check
      _
    $region43: #{tpu_custom_call.1} parent=1 // pred_check_branch
      %715 = sbr.rel (0) target = $region45
    $region44: #{tpu_custom_call.1} parent=1 // pred_region
      %716 = dma.done [#allocation4], 64
    $region45: #{tpu_custom_call.1} parent=1 // pred_fallthru
      _
    %717 = vsyncpa [#allocation3], 1
    %718 = vsyncpa [#allocation6], 1
    %719 = vsyncpa [#allocation9], 1
    %720 = vsyncpa [#allocation4], 1

</llo_original>
